<compile_context>
chip_gen: v7x
topology: tpu7x:2x2x1
jax: 0.10.0
libtpu: 0.0.40
codegen_flags: <defaults>
</compile_context>

<pallas_src>
import functools

import jax
import jax.numpy as jnp
from jax.experimental import pallas as pl
from jax.experimental.pallas import tpu as pltpu


def _round_up(a, b):
    return (a + b - 1) // b * b


def _pick_tile_h(h, wp, n_batch, target_pos=4096, max_rows=64):
    """Pick a multiple-of-8 divisor of h (or h itself) targeting ~target_pos
    flat positions per grid step, keeping >= 2 grid steps when batch == 1 so
    both v7x TensorCores get work."""
    cands = [t for t in range(8, min(h, max_rows) + 1, 8) if h % t == 0]
    if not cands:
        # TODO(synk): for H not divisible by 8, fall back to whole-height tiles;
        # relying on Pallas edge masking would bound VMEM for huge odd H.
        return h

    def fits(t):
        return t * wp <= max(target_pos, 8 * wp)

    pick = max([t for t in cands if fits(t)] or [min(cands)])
    if n_batch == 1 and h // pick < 2:
        alts = [t for t in cands if h // t >= 2]
        if alts:
            pick = max([t for t in alts if fits(t)] or [min(alts)])
    return pick


# --------------------------------------------------------------------------
# Fused conv3x3 (stride 1, pad 1) + bias + ReLU kernel, compact NCHW output
# --------------------------------------------------------------------------
def _make_conv_kernel(wp, tile_h, w_out):
    """3x3 conv as 9 constant-offset taps of a flattened, zero-padded row tile."""
    l_pos = tile_h * wp  # flat output positions per step (incl. 2 pad cols / row)

    def kernel(x_ref, w_ref, b_ref, o_ref):
        # x_ref: (cin, l_in)    TILE_H rows + halo rows, flattened + tail pad
        # w_ref: (cout, 9*cin)  folded weights (compute dtype), resident
        # b_ref: (cout, 1)      bias (f32), resident
        # o_ref: (cout, tile_h, w_out)  compact NCHW output block
        taps = []
        for dy in range(3):
            for dx in range(3):
                off = dy * wp + dx                       # static tap offset
                taps.append(x_ref[:, off:off + l_pos])   # (cin, l_pos)
        patch = jnp.concatenate(taps, axis=0)            # (9*cin, l_pos)
        acc = jnp.dot(w_ref[...], patch,
                      preferred_element_type=jnp.float32)  # (cout, l_pos) f32
        acc = jnp.maximum(acc + b_ref[...], 0.0).astype(o_ref.dtype)
        # Drop the 2 pad columns of every row while storing -> no epilogue pass.
        for r in range(tile_h):
            o_ref[:, r, :] = acc[:, r * wp:r * wp + w_out]

    return kernel


@functools.partial(jax.jit, static_argnames=("tile_h", "compute_dtype"))
def conv3x3_relu_pallas(x, weight, bias, input_shift, *, tile_h=None,
                        compute_dtype=None):
    """relu(conv3x3(x + shift_c, weight) + bias), stride 1, zero pad 1, NCHW.

    Writes the compact (N, Cout, H, W) result directly from the kernel.
    """
    n, cin, h, w = x.shape
    cout = weight.shape[0]
    assert weight.shape == (cout, cin, 3, 3)
    out_dtype = x.dtype
    cdt = jnp.dtype(x.dtype if compute_dtype is None else compute_dtype)

    wp = w + 2                                    # padded row width
    if tile_h is None:
        tile_h = _pick_tile_h(h, wp, n)
    assert tile_h == h or (tile_h % 8 == 0 and h % tile_h == 0), \
        "tile_h must be a multiple-of-8 divisor of H (or equal H)"
    n_ht = h // tile_h
    l_pos = tile_h * wp
    l_raw = (tile_h + 2) * wp
    l_in = _round_up(l_raw + 2, 128)              # +2: tail of the (dy=2,dx=2) tap

    # Rescale-offset fold: shift the raw input per channel *before* zero padding
    # so the conv's zero padding corresponds exactly to rescale(x) == 0.
    xs = (x + input_shift.reshape(1, cin, 1, 1).astype(x.dtype)).astype(cdt)
    xp = jnp.pad(xs, ((0, 0), (0, 0), (1, 1), (1, 1)))        # (n, cin, h+2, wp)
    # Row-tiled halo slab: bounded per-step input VMEM, independent of H*W.
    # (shift + pad + gather + reshape all fuse into the single slab write.)
    row_idx = jnp.arange(n_ht)[:, None] * tile_h + jnp.arange(tile_h + 2)[None, :]
    slab = xp[:, :, row_idx, :]                               # (n, cin, n_ht, th+2, wp)
    slab = jnp.moveaxis(slab, 2, 1).reshape(n, n_ht, cin, l_raw)
    slab = jnp.pad(slab, ((0, 0), (0, 0), (0, 0), (0, l_in - l_raw)))

    # weight column ordering (dy*3 + dx)*cin + c matches the tap concat order.
    w2d = jnp.transpose(weight, (0, 2, 3, 1)).reshape(cout, 9 * cin).astype(cdt)
    b2d = bias.reshape(cout, 1).astype(jnp.float32)

    csize, osize = cdt.itemsize, jnp.dtype(out_dtype).itemsize
    in_blk = cin * l_in * csize
    out_blk = cout * tile_h * _round_up(w, 128) * osize       # lane-padded VMEM tile
    w_bytes, b_bytes = cout * 9 * cin * csize, cout * 4
    patch_bytes = 9 * cin * _round_up(l_pos, 128) * csize
    acc_bytes = cout * _round_up(l_pos, 128) * 4
    vmem_limit = int(min(64 * 2 ** 20,
                         max(8 * 2 ** 20,
                             2 * (2 * (in_blk + out_blk) + w_bytes + b_bytes
                                  + patch_bytes + acc_bytes))))

    flops = 2 * n * n_ht * l_pos * (9 * cin) * cout
    bytes_accessed = (n * n_ht * in_blk + w_bytes + b_bytes
                      + n * cout * h * w * osize)

    kernel = _make_conv_kernel(wp, tile_h, w)
    out = pl.pallas_call(
        kernel,
        out_shape=jax.ShapeDtypeStruct((n, cout, h, w), out_dtype),
        grid=(n, n_ht),
        in_specs=[
            pl.BlockSpec((None, None, cin, l_in), lambda i, j: (i, j, 0, 0)),
            pl.BlockSpec((cout, 9 * cin), lambda i, j: (0, 0)),   # resident weights
            pl.BlockSpec((cout, 1), lambda i, j: (0, 0)),         # resident bias
        ],
        out_specs=pl.BlockSpec((None, cout, tile_h, w), lambda i, j: (i, 0, j, 0)),
        compiler_params=pltpu.CompilerParams(
            dimension_semantics=("parallel", "parallel"),
            vmem_limit_bytes=vmem_limit),
        cost_estimate=pl.CostEstimate(flops=flops, transcendentals=0,
                                      bytes_accessed=bytes_accessed),
    )(slab, w2d, b2d)
    return out


# --------------------------------------------------------------------------
# FeatureExtractor equivalent
# --------------------------------------------------------------------------
class FeatureExtractorPallas:
    """Mirrors vsait FeatureExtractor.forward:
        x = ((x*0.5 + 0.5) - mu[idx]) / sigma[idx]   (if RESCALE given; broadcasts)
        x = x.expand(-1, IN_CHANNELS, -1, -1)        (if IN_CHANNELS > C)
        return net(x)                                 (dict of features)
    Rescale + channel expand are folded algebraically into the conv stem (exact).
    """

    def __init__(self, cfg, key, tile_h=None, compute_dtype=None):
        self.in_channels = cfg.get("IN_CHANNELS")
        self.tile_h = tile_h
        self.compute_dtype = compute_dtype

        rescale = cfg.get("RESCALE", [])
        if isinstance(rescale, dict):
            src_mu, src_sigma = rescale.get("source", [[], []])
            tgt_mu, tgt_sigma = rescale.get("target", [[], []])
            self.mus = [jnp.asarray(src_mu, jnp.float32),
                        jnp.asarray(tgt_mu, jnp.float32)]
            self.sigmas = [jnp.asarray(src_sigma, jnp.float32),
                           jnp.asarray(tgt_sigma, jnp.float32)]
            self._rescale_index = {"source": 0, "target": 1}
        elif rescale:
            mu, sigma = rescale
            self.mus = [jnp.asarray(mu, jnp.float32)]
            self.sigmas = [jnp.asarray(sigma, jnp.float32)]
            self._rescale_index = {"source": 0, "target": 0}
        else:
            self.mus, self.sigmas = [None], [None]
            self._rescale_index = {"source": 0, "target": 0}

        # synthetic backbone stem (stands in for the torchvision MODEL weights)
        cout = cfg.get("HIDDEN", 32)
        cin = self.in_channels if self.in_channels is not None else 3
        kw_, kb_ = jax.random.split(key)
        self.conv_w = (jax.random.normal(kw_, (cout, cin, 3, 3), jnp.float32)
                       * (2.0 / (cin * 9)) ** 0.5)
        self.conv_b = jax.random.normal(kb_, (cout,), jnp.float32) * 0.01
        nodes = cfg.get("RETURN_NODES", ["conv1"])
        self.return_nodes = ({k: str(i) for i, k in enumerate(nodes)}
                             if isinstance(nodes, list) else {nodes: "_"})

    def _fold(self, c_x, domain):
        """Exact fold of (rescale -> channel broadcast/expand -> conv weights)."""
        idx = self._rescale_index.get(domain, 0)
        mu, sigma = self.mus[idx], self.sigmas[idx]
        w, b = self.conv_w, self.conv_b
        cin_w = w.shape[1]

        has_rescale = mu is not None and int(mu.size) > 0
        r = int(mu.size) if has_rescale else 0
        c1 = max(c_x, r) if has_rescale else c_x      # channels after rescale broadcast
        if has_rescale and r > 1:
            assert c_x in (1, r), "RESCALE channel count incompatible with input"
        cf = c1
        if self.in_channels is not None and self.in_channels > c1:
            assert c1 == 1, "expand only valid for singleton channel dim"
            cf = self.in_channels
        assert cf == cin_w, f"backbone expects {cin_w} channels, forward makes {cf}"

        if has_rescale:
            scale = jnp.broadcast_to((0.5 / sigma).astype(jnp.float32), (cf,))
            shift = jnp.broadcast_to((1.0 - 2.0 * mu).astype(jnp.float32), (cf,))
        else:
            scale = jnp.ones((cf,), jnp.float32)
            shift = jnp.zeros((cf,), jnp.float32)

        # Fold the per-(final)-channel rescale scale into the weights FIRST.
        w = w * scale[None, :, None, None]
        if c_x == 1 and cf > 1 and r <= 1:
            # All expanded channels share one source pixel and one shift:
            # collapse to a 1-channel conv (sum of the per-channel-scaled weights).
            w = jnp.sum(w, axis=1, keepdims=True)     # (cout, 1, 3, 3)
            shift = shift[:1]
            broadcast_input = False
        else:
            # Per-channel shifts (e.g. ImageNet mean/std on a grayscale input):
            # materialize the cheap (cin<=3) channel broadcast instead.
            broadcast_input = (c_x == 1 and cf > 1)
        return w, b, shift, broadcast_input

    def __call__(self, x, domain="source"):
        w_eff, b, shift, bcast = self._fold(x.shape[1], domain)
        x_k = x
        if bcast:
            x_k = jnp.broadcast_to(
                x, (x.shape[0], w_eff.shape[1], x.shape[2], x.shape[3]))
        feats = conv3x3_relu_pallas(x_k, w_eff, b, shift,
                                    tile_h=self.tile_h,
                                    compute_dtype=self.compute_dtype)
        # RETURN_NODES list -> output dict keyed "0", like the torch module
        return {"0": feats}


# --------------------------------------------------------------------------
def _reference_forward(x, fe, domain="source"):
    # pure-JAX reference replicating the PyTorch op order exactly
    idx = fe._rescale_index.get(domain, 0)
    mu, sigma = fe.mus[idx], fe.sigmas[idx]
    if mu is not None and mu.size > 0:
        x = ((x * 0.5 + 0.5) - mu.reshape(1, -1, 1, 1)) / sigma.reshape(1, -1, 1, 1)
    if fe.in_channels is not None and fe.in_channels > x.shape[1]:
        n, c, h, w = x.shape
        x = jnp.broadcast_to(x, (n, fe.in_channels, h, w))
    y = jax.lax.conv_general_dilated(
        x, fe.conv_w, window_strides=(1, 1), padding=((1, 1), (1, 1)),
        dimension_numbers=("NCHW", "OIHW", "NCHW"),
        precision=jax.lax.Precision.HIGHEST)
    y = y + fe.conv_b.reshape(1, -1, 1, 1)
    return jnp.maximum(y, 0.0)


if __name__ == "__main__":
    key = jax.random.PRNGKey(0)
    kx1, kx2, kp = jax.random.split(key, 3)

    # Case 1: scalar RESCALE + 1->3 channel expand (collapsed cin=1 kernel path).
    cfg1 = {"IN_CHANNELS": 3, "RESCALE": [[0.449], [0.226]],
            "MODEL": "synthetic_conv_stem", "RETURN_NODES": ["conv1"], "HIDDEN": 32}
    x1 = jax.random.normal(kx1, (2, 1, 16, 16), jnp.float32)     # NCHW
    fe1 = FeatureExtractorPallas(cfg1, kp, tile_h=8)             # grid (2, 2)
    out1 = jax.block_until_ready(fe1(x1, domain="source")["0"])
    ref1 = _reference_forward(x1, fe1)
    assert out1.shape == ref1.shape == (2, 32, 16, 16)
    err1 = float(jnp.max(jnp.abs(out1 - ref1)))
    assert err1 < 2e-3, f"case1 max abs error {err1}"

    # Case 2: per-channel (ImageNet) RESCALE broadcast over a grayscale input
    # (the previously unsupported configuration; exercises the per-channel fold).
    cfg2 = {"IN_CHANNELS": 3,
            "RESCALE": [[0.485, 0.456, 0.406], [0.229, 0.224, 0.225]],
            "MODEL": "synthetic_conv_stem", "RETURN_NODES": ["conv1"], "HIDDEN": 32}
    x2 = jax.random.normal(kx2, (2, 1, 16, 16), jnp.float32)
    fe2 = FeatureExtractorPallas(cfg2, kp)                        # auto tile_h
    out2 = jax.block_until_ready(fe2(x2, domain="source")["0"])
    ref2 = _reference_forward(x2, fe2)
    assert out2.shape == ref2.shape == (2, 32, 16, 16)
    err2 = float(jnp.max(jnp.abs(out2 - ref2)))
    assert err2 < 5e-3, f"case2 max abs error {err2}"

    # Case 3: bf16 compute path (v6e/v7x recommendation), f32 MXU accumulate.
    fe3 = FeatureExtractorPallas(cfg1, kp, tile_h=8, compute_dtype=jnp.bfloat16)
    out3 = jax.block_until_ready(fe3(x1, domain="source")["0"])
    err3 = float(jnp.max(jnp.abs(out3.astype(jnp.float32) - ref1)))
    assert err3 < 0.25, f"case3 (bf16) max abs error {err3}"

    print("KERNEL_OK")
</pallas_src>

<mosaic_0001>
module attributes {stable_mosaic.version = 11 : i64} {
  func.func @kernel(%arg0: i32, %arg1: i32, %arg2: memref<1x1x1x256xf32, #tpu.memory_space<vmem>>, %arg3: memref<32x9xf32, #tpu.memory_space<vmem>>, %arg4: memref<32x1xf32, #tpu.memory_space<vmem>>, %arg5: memref<1x32x8x16xf32, #tpu.memory_space<vmem>>) attributes {dimension_semantics = [#tpu.dimension_semantics<parallel>, #tpu.dimension_semantics<parallel>], iteration_bounds = array<i64: 2, 2>, scalar_prefetch = 0 : i64, scratch_operands = 0 : i64, tpu.core_type = #tpu.core_type<tc>, window_params = [{transform_indices = @transform_0, window_bounds = array<i64: 1, 1, 1, 256>}, {pipeline_mode = #tpu.pipeline_mode<synchronous>, transform_indices = @transform_1, window_bounds = array<i64: 32, 9>}, {pipeline_mode = #tpu.pipeline_mode<synchronous>, transform_indices = @transform_2, window_bounds = array<i64: 32, 1>}, {transform_indices = @transform_3, window_bounds = array<i64: 1, 32, 8, 16>}]} {
    %c0 = arith.constant 0 : index
    %c0_0 = arith.constant 0 : index
    %c0_1 = arith.constant 0 : index
    %c0_2 = arith.constant 0 : index
    %0 = vector.load %arg2[%c0, %c0_0, %c0_1, %c0_2] : memref<1x1x1x256xf32, #tpu.memory_space<vmem>>, vector<1x1x1x144xf32>
    %1 = vector.shape_cast %0 : vector<1x1x1x144xf32> to vector<1x144xf32>
    %c0_3 = arith.constant 0 : index
    %c0_4 = arith.constant 0 : index
    %c0_5 = arith.constant 0 : index
    %c1 = arith.constant 1 : index
    %2 = vector.load %arg2[%c0_3, %c0_4, %c0_5, %c1] : memref<1x1x1x256xf32, #tpu.memory_space<vmem>>, vector<1x1x1x144xf32>
    %3 = vector.shape_cast %2 : vector<1x1x1x144xf32> to vector<1x144xf32>
    %c0_6 = arith.constant 0 : index
    %c0_7 = arith.constant 0 : index
    %c0_8 = arith.constant 0 : index
    %c2 = arith.constant 2 : index
    %4 = vector.load %arg2[%c0_6, %c0_7, %c0_8, %c2] : memref<1x1x1x256xf32, #tpu.memory_space<vmem>>, vector<1x1x1x144xf32>
    %5 = vector.shape_cast %4 : vector<1x1x1x144xf32> to vector<1x144xf32>
    %c0_9 = arith.constant 0 : index
    %c0_10 = arith.constant 0 : index
    %c0_11 = arith.constant 0 : index
    %c18 = arith.constant 18 : index
    %6 = vector.load %arg2[%c0_9, %c0_10, %c0_11, %c18] : memref<1x1x1x256xf32, #tpu.memory_space<vmem>>, vector<1x1x1x144xf32>
    %7 = vector.shape_cast %6 : vector<1x1x1x144xf32> to vector<1x144xf32>
    %c0_12 = arith.constant 0 : index
    %c0_13 = arith.constant 0 : index
    %c0_14 = arith.constant 0 : index
    %c19 = arith.constant 19 : index
    %8 = vector.load %arg2[%c0_12, %c0_13, %c0_14, %c19] : memref<1x1x1x256xf32, #tpu.memory_space<vmem>>, vector<1x1x1x144xf32>
    %9 = vector.shape_cast %8 : vector<1x1x1x144xf32> to vector<1x144xf32>
    %c0_15 = arith.constant 0 : index
    %c0_16 = arith.constant 0 : index
    %c0_17 = arith.constant 0 : index
    %c20 = arith.constant 20 : index
    %10 = vector.load %arg2[%c0_15, %c0_16, %c0_17, %c20] : memref<1x1x1x256xf32, #tpu.memory_space<vmem>>, vector<1x1x1x144xf32>
    %11 = vector.shape_cast %10 : vector<1x1x1x144xf32> to vector<1x144xf32>
    %c0_18 = arith.constant 0 : index
    %c0_19 = arith.constant 0 : index
    %c0_20 = arith.constant 0 : index
    %c36 = arith.constant 36 : index
    %12 = vector.load %arg2[%c0_18, %c0_19, %c0_20, %c36] : memref<1x1x1x256xf32, #tpu.memory_space<vmem>>, vector<1x1x1x144xf32>
    %13 = vector.shape_cast %12 : vector<1x1x1x144xf32> to vector<1x144xf32>
    %c0_21 = arith.constant 0 : index
    %c0_22 = arith.constant 0 : index
    %c0_23 = arith.constant 0 : index
    %c37 = arith.constant 37 : index
    %14 = vector.load %arg2[%c0_21, %c0_22, %c0_23, %c37] : memref<1x1x1x256xf32, #tpu.memory_space<vmem>>, vector<1x1x1x144xf32>
    %15 = vector.shape_cast %14 : vector<1x1x1x144xf32> to vector<1x144xf32>
    %c0_24 = arith.constant 0 : index
    %c0_25 = arith.constant 0 : index
    %c0_26 = arith.constant 0 : index
    %c38 = arith.constant 38 : index
    %16 = vector.load %arg2[%c0_24, %c0_25, %c0_26, %c38] : memref<1x1x1x256xf32, #tpu.memory_space<vmem>>, vector<1x1x1x144xf32>
    %17 = vector.shape_cast %16 : vector<1x1x1x144xf32> to vector<1x144xf32>
    %18 = tpu.concatenate %1, %3, %5, %7, %9, %11, %13, %15, %17 in 0 : vector<1x144xf32>, vector<1x144xf32>, vector<1x144xf32>, vector<1x144xf32>, vector<1x144xf32>, vector<1x144xf32>, vector<1x144xf32>, vector<1x144xf32>, vector<1x144xf32> -> vector<9x144xf32>
    %c0_27 = arith.constant 0 : index
    %c0_28 = arith.constant 0 : index
    %19 = vector.load %arg3[%c0_27, %c0_28] : memref<32x9xf32, #tpu.memory_space<vmem>>, vector<32x9xf32>
    %cst = arith.constant dense<0.000000e+00> : vector<32x144xf32>
    %20 = tpu.matmul %19, %18, %cst {dimension_numbers = #tpu.dot_dimension_numbers<[1], [0], [0], [1], [0, 0, 1, 1], [], []>} : vector<32x9xf32>, vector<9x144xf32>, vector<32x144xf32> -> vector<32x144xf32>
    %c0_29 = arith.constant 0 : index
    %c0_30 = arith.constant 0 : index
    %21 = vector.load %arg4[%c0_29, %c0_30] : memref<32x1xf32, #tpu.memory_space<vmem>>, vector<32x1xf32>
    %22 = vector.broadcast %21 : vector<32x1xf32> to vector<32x144xf32>
    %23 = arith.addf %20, %22 : vector<32x144xf32>
    %cst_31 = arith.constant 0.000000e+00 : f32
    %24 = vector.broadcast %cst_31 : f32 to vector<32x144xf32>
    %25 = arith.maximumf %23, %24 : vector<32x144xf32>
    %26 = vector.extract_strided_slice %25 {offsets = [0, 0], sizes = [32, 16], strides = [1, 1]} : vector<32x144xf32> to vector<32x16xf32>
    %c0_32 = arith.constant 0 : index
    %c0_33 = arith.constant 0 : index
    %c0_34 = arith.constant 0 : index
    %c0_35 = arith.constant 0 : index
    %27 = vector.load %arg5[%c0_32, %c0_33, %c0_34, %c0_35] : memref<1x32x8x16xf32, #tpu.memory_space<vmem>>, vector<1x32x1x16xf32>
    %28 = vector.shape_cast %27 : vector<1x32x1x16xf32> to vector<32x16xf32>
    %29 = vector.shape_cast %26 : vector<32x16xf32> to vector<1x32x1x16xf32>
    tpu.vector_store %arg5[%c0_32, %c0_33, %c0_34, %c0_35], %29 {strides = array<i32>} : memref<1x32x8x16xf32, #tpu.memory_space<vmem>>, vector<1x32x1x16xf32>,
    %30 = vector.extract_strided_slice %25 {offsets = [0, 18], sizes = [32, 16], strides = [1, 1]} : vector<32x144xf32> to vector<32x16xf32>
    %c0_36 = arith.constant 0 : index
    %c0_37 = arith.constant 0 : index
    %c1_38 = arith.constant 1 : index
    %c0_39 = arith.constant 0 : index
    %31 = vector.load %arg5[%c0_36, %c0_37, %c1_38, %c0_39] : memref<1x32x8x16xf32, #tpu.memory_space<vmem>>, vector<1x32x1x16xf32>
    %32 = vector.shape_cast %31 : vector<1x32x1x16xf32> to vector<32x16xf32>
    %33 = vector.shape_cast %30 : vector<32x16xf32> to vector<1x32x1x16xf32>
    tpu.vector_store %arg5[%c0_36, %c0_37, %c1_38, %c0_39], %33 {strides = array<i32>} : memref<1x32x8x16xf32, #tpu.memory_space<vmem>>, vector<1x32x1x16xf32>,
    %34 = vector.extract_strided_slice %25 {offsets = [0, 36], sizes = [32, 16], strides = [1, 1]} : vector<32x144xf32> to vector<32x16xf32>
    %c0_40 = arith.constant 0 : index
    %c0_41 = arith.constant 0 : index
    %c2_42 = arith.constant 2 : index
    %c0_43 = arith.constant 0 : index
    %35 = vector.load %arg5[%c0_40, %c0_41, %c2_42, %c0_43] : memref<1x32x8x16xf32, #tpu.memory_space<vmem>>, vector<1x32x1x16xf32>
    %36 = vector.shape_cast %35 : vector<1x32x1x16xf32> to vector<32x16xf32>
    %37 = vector.shape_cast %34 : vector<32x16xf32> to vector<1x32x1x16xf32>
    tpu.vector_store %arg5[%c0_40, %c0_41, %c2_42, %c0_43], %37 {strides = array<i32>} : memref<1x32x8x16xf32, #tpu.memory_space<vmem>>, vector<1x32x1x16xf32>,
    %38 = vector.extract_strided_slice %25 {offsets = [0, 54], sizes = [32, 16], strides = [1, 1]} : vector<32x144xf32> to vector<32x16xf32>
    %c0_44 = arith.constant 0 : index
    %c0_45 = arith.constant 0 : index
    %c3 = arith.constant 3 : index
    %c0_46 = arith.constant 0 : index
    %39 = vector.load %arg5[%c0_44, %c0_45, %c3, %c0_46] : memref<1x32x8x16xf32, #tpu.memory_space<vmem>>, vector<1x32x1x16xf32>
    %40 = vector.shape_cast %39 : vector<1x32x1x16xf32> to vector<32x16xf32>
    %41 = vector.shape_cast %38 : vector<32x16xf32> to vector<1x32x1x16xf32>
    tpu.vector_store %arg5[%c0_44, %c0_45, %c3, %c0_46], %41 {strides = array<i32>} : memref<1x32x8x16xf32, #tpu.memory_space<vmem>>, vector<1x32x1x16xf32>,
    %42 = vector.extract_strided_slice %25 {offsets = [0, 72], sizes = [32, 16], strides = [1, 1]} : vector<32x144xf32> to vector<32x16xf32>
    %c0_47 = arith.constant 0 : index
    %c0_48 = arith.constant 0 : index
    %c4 = arith.constant 4 : index
    %c0_49 = arith.constant 0 : index
    %43 = vector.load %arg5[%c0_47, %c0_48, %c4, %c0_49] : memref<1x32x8x16xf32, #tpu.memory_space<vmem>>, vector<1x32x1x16xf32>
    %44 = vector.shape_cast %43 : vector<1x32x1x16xf32> to vector<32x16xf32>
    %45 = vector.shape_cast %42 : vector<32x16xf32> to vector<1x32x1x16xf32>
    tpu.vector_store %arg5[%c0_47, %c0_48, %c4, %c0_49], %45 {strides = array<i32>} : memref<1x32x8x16xf32, #tpu.memory_space<vmem>>, vector<1x32x1x16xf32>,
    %46 = vector.extract_strided_slice %25 {offsets = [0, 90], sizes = [32, 16], strides = [1, 1]} : vector<32x144xf32> to vector<32x16xf32>
    %c0_50 = arith.constant 0 : index
    %c0_51 = arith.constant 0 : index
    %c5 = arith.constant 5 : index
    %c0_52 = arith.constant 0 : index
    %47 = vector.load %arg5[%c0_50, %c0_51, %c5, %c0_52] : memref<1x32x8x16xf32, #tpu.memory_space<vmem>>, vector<1x32x1x16xf32>
    %48 = vector.shape_cast %47 : vector<1x32x1x16xf32> to vector<32x16xf32>
    %49 = vector.shape_cast %46 : vector<32x16xf32> to vector<1x32x1x16xf32>
    tpu.vector_store %arg5[%c0_50, %c0_51, %c5, %c0_52], %49 {strides = array<i32>} : memref<1x32x8x16xf32, #tpu.memory_space<vmem>>, vector<1x32x1x16xf32>,
    %50 = vector.extract_strided_slice %25 {offsets = [0, 108], sizes = [32, 16], strides = [1, 1]} : vector<32x144xf32> to vector<32x16xf32>
    %c0_53 = arith.constant 0 : index
    %c0_54 = arith.constant 0 : index
    %c6 = arith.constant 6 : index
    %c0_55 = arith.constant 0 : index
    %51 = vector.load %arg5[%c0_53, %c0_54, %c6, %c0_55] : memref<1x32x8x16xf32, #tpu.memory_space<vmem>>, vector<1x32x1x16xf32>
    %52 = vector.shape_cast %51 : vector<1x32x1x16xf32> to vector<32x16xf32>
    %53 = vector.shape_cast %50 : vector<32x16xf32> to vector<1x32x1x16xf32>
    tpu.vector_store %arg5[%c0_53, %c0_54, %c6, %c0_55], %53 {strides = array<i32>} : memref<1x32x8x16xf32, #tpu.memory_space<vmem>>, vector<1x32x1x16xf32>,
    %54 = vector.extract_strided_slice %25 {offsets = [0, 126], sizes = [32, 16], strides = [1, 1]} : vector<32x144xf32> to vector<32x16xf32>
    %c0_56 = arith.constant 0 : index
    %c0_57 = arith.constant 0 : index
    %c7 = arith.constant 7 : index
    %c0_58 = arith.constant 0 : index
    %55 = vector.load %arg5[%c0_56, %c0_57, %c7, %c0_58] : memref<1x32x8x16xf32, #tpu.memory_space<vmem>>, vector<1x32x1x16xf32>
    %56 = vector.shape_cast %55 : vector<1x32x1x16xf32> to vector<32x16xf32>
    %57 = vector.shape_cast %54 : vector<32x16xf32> to vector<1x32x1x16xf32>
    tpu.vector_store %arg5[%c0_56, %c0_57, %c7, %c0_58], %57 {strides = array<i32>} : memref<1x32x8x16xf32, #tpu.memory_space<vmem>>, vector<1x32x1x16xf32>,
    return
  }
  func.func @transform_0(%arg0: i32, %arg1: i32) -> (i32, i32, i32, i32) {
    %c0_i32 = arith.constant 0 : i32
    %c0_i32_0 = arith.constant 0 : i32
    %c0_i32_1 = arith.constant 0 : i32
    return %arg0, %arg1, %c0_i32, %c0_i32_0 : i32, i32, i32, i32
  }
  func.func @transform_1(%arg0: i32, %arg1: i32) -> (i32, i32) {
    %c0_i32 = arith.constant 0 : i32
    %c0_i32_0 = arith.constant 0 : i32
    %c0_i32_1 = arith.constant 0 : i32
    return %c0_i32, %c0_i32_0 : i32, i32
  }
  func.func @transform_2(%arg0: i32, %arg1: i32) -> (i32, i32) {
    %c0_i32 = arith.constant 0 : i32
    %c0_i32_0 = arith.constant 0 : i32
    %c0_i32_1 = arith.constant 0 : i32
    return %c0_i32, %c0_i32_0 : i32, i32
  }
  func.func @transform_3(%arg0: i32, %arg1: i32) -> (i32, i32, i32, i32) {
    %c0_i32 = arith.constant 0 : i32
    %c0_i32_0 = arith.constant 0 : i32
    %c0_i32_1 = arith.constant 0 : i32
    return %arg0, %c0_i32, %arg1, %c0_i32_0 : i32, i32, i32, i32
  }
}

</mosaic_0001>

<llo_original>
// kernel: conv3x3_relu_pallas.1
$region0: #{conv3x3_relu_pallas.1}
  #allocation0 [shape = 'u32[]', space=smem, size = 0x4, offset = 0x4, fixed_abs, tag = 'smem constant byte address 0x4 - core index']
  #allocation1 [shape = 'u32[144,128]{1,0:T(1,128)}', space=vmem, size = 0x12000, scoped, tag = 'internal scratch']
  %s0 = inlined_call_operand.vmem [shape: f32[2,2,1,256], index: 0, kind: input, shape index: {}]
  %s1 = inlined_call_operand.vmem [shape: f32[32,9], index: 1, kind: input, shape index: {}]
  %s2 = inlined_call_operand.vmem [shape: f32[32,1], index: 2, kind: input, shape index: {}]
  %s3 = inlined_call_operand.vmem [shape: f32[2,32,16,16], index: 3, kind: output, shape index: {}]
  %s4 = sld [smem:[#allocation0]]
  $region79: #{conv3x3_relu_pallas.1} parent=0
    _
  %s6 = ssub.s32 1, %s4
  %s7 = scalar_select 0, %s6, %s4
  $region1: #{conv3x3_relu_pallas.1} parent=0
    #allocation2 [shape = 'u8[262144]{0}', space=vmem, size = 0x40000, scoped, tag = 'output window, operand 0']
    loop: start=0, step=1, limit=6
    $region2: #{conv3x3_relu_pallas.1} parent=1 // loop_pre_header
      _
    $region3: #{conv3x3_relu_pallas.1} parent=1 // loop_header
      %s9 = sphi 0, %s13
      %p10 = scmp.ge.s32.totalorder %s9, 6
      %s16 = sphi 0, %s28
      %s17 = sphi 0, %s24
      %s18 = sphi 0, %s16
      %s19 = sphi 0, %s17
      %s20 = sphi 0, %s18
      %s21 = sphi 0, %s19
      %s33 = sphi 0, %s35
      %s36 = sphi 0, %s33
      %s37 = sphi 0, %s36
      %s53 = sphi 0, %s37
      %s57 = sphi 0, %s57
      %s59 = sphi 0, %s57
      %s60 = sphi 0, %s59
      %s74 = sphi 0, %s60
      %s78 = sphi 0, %s78
      %s80 = sphi 0, %s78
      %s81 = sphi 0, %s80
      %s95 = sphi 0, %s81
      %s103 = sphi 0, %s105
      %s106 = sphi 0, %s103
      %s107 = sphi 0, %s106
      %s123 = sphi 0, %s107
    $region4: #{conv3x3_relu_pallas.1} parent=1 // loop_header_branch
      %12 = sbr.rel (%p10) target = $region8
    $region5: #{conv3x3_relu_pallas.1} parent=1 // loop_body
      %s14 = ssub.s32 %s9, 1
      %s15 = ssub.s32 %s9, 2
      %s22 = sadd.s32 1, %s17
      %p23 = scmp.ge.s32.totalorder %s22, 2
      %s24 = scalar_select %p23, 0, %s22
      %s25 = sadd.s32 1, %s16
      %s26 = scalar_select %p23, %s25, %s16
      %p27 = scmp.ge.s32.totalorder %s26, 2
      %s28 = scalar_select %p27, 0, %s26
      %s29 = ssub.s32 %s16, %s28
      %s30 = ssub.s32 %s17, %s24
      %s31 = sor.u32 %s29, %s30
      %p32 = scmp.eq.s32.totalorder %s31, 0
      %s34 = sadd.s32 %s33, 1
      %s35 = scalar_select %p32, %s33, %s34
      %p38 = pneg %p32
      %p39 = scmp.eq.s32.totalorder %s9, 3
      %p40 = por %p38, %p39
      %p41 = scmp.ne.s32.totalorder %s33, %s36
      %p42 = scmp.eq.s32.totalorder %s9, 0
      %p43 = por %p41, %p42
      %p44 = scmp.ne.s32.totalorder %s33, %s36
      %p45 = scmp.eq.s32.totalorder %s14, 3
      %p46 = por %p44, %p45
      %p47 = scmp.ne.s32.totalorder %s36, %s37
      %p48 = scmp.eq.s32.totalorder %s14, 0
      %p49 = por %p47, %p48
      %p50 = scmp.ne.s32.totalorder %s36, %s37
      %p51 = scmp.eq.s32.totalorder %s15, 3
      %p52 = por %p50, %p51
      %p54 = scmp.ne.s32.totalorder %s37, %s53
      %p55 = scmp.eq.s32.totalorder %s15, 0
      %p56 = por %p54, %p55
      %s58 = sadd.s32 %s57, 1
      %p61 = scmp.eq.s32.totalorder %s9, 3
      %p62 = scmp.ne.s32.totalorder %s57, %s59
      %p63 = scmp.eq.s32.totalorder %s9, 0
      %p64 = por %p62, %p63
      %p65 = scmp.ne.s32.totalorder %s57, %s59
      %p66 = scmp.eq.s32.totalorder %s14, 3
      %p67 = por %p65, %p66
      %p68 = scmp.ne.s32.totalorder %s59, %s60
      %p69 = scmp.eq.s32.totalorder %s14, 0
      %p70 = por %p68, %p69
      %p71 = scmp.ne.s32.totalorder %s59, %s60
      %p72 = scmp.eq.s32.totalorder %s15, 3
      %p73 = por %p71, %p72
      %p75 = scmp.ne.s32.totalorder %s60, %s74
      %p76 = scmp.eq.s32.totalorder %s15, 0
      %p77 = por %p75, %p76
      %s79 = sadd.s32 %s78, 1
      %p82 = scmp.eq.s32.totalorder %s9, 3
      %p83 = scmp.ne.s32.totalorder %s78, %s80
      %p84 = scmp.eq.s32.totalorder %s9, 0
      %p85 = por %p83, %p84
      %p86 = scmp.ne.s32.totalorder %s78, %s80
      %p87 = scmp.eq.s32.totalorder %s14, 3
      %p88 = por %p86, %p87
      %p89 = scmp.ne.s32.totalorder %s80, %s81
      %p90 = scmp.eq.s32.totalorder %s14, 0
      %p91 = por %p89, %p90
      %p92 = scmp.ne.s32.totalorder %s80, %s81
      %p93 = scmp.eq.s32.totalorder %s15, 3
      %p94 = por %p92, %p93
      %p96 = scmp.ne.s32.totalorder %s81, %s95
      %p97 = scmp.eq.s32.totalorder %s15, 0
      %p98 = por %p96, %p97
      %s99 = ssub.s32 %s16, %s28
      %s100 = ssub.s32 %s17, %s24
      %s101 = sor.u32 %s99, %s100
      %p102 = scmp.eq.s32.totalorder %s101, 0
      %s104 = sadd.s32 %s103, 1
      %s105 = scalar_select %p102, %s103, %s104
      %p108 = pneg %p102
      %p109 = scmp.eq.s32.totalorder %s9, 3
      %p110 = por %p108, %p109
      %p111 = scmp.ne.s32.totalorder %s103, %s106
      %p112 = scmp.eq.s32.totalorder %s9, 0
      %p113 = por %p111, %p112
      %p114 = scmp.ne.s32.totalorder %s103, %s106
      %p115 = scmp.eq.s32.totalorder %s14, 3
      %p116 = por %p114, %p115
      %p117 = scmp.ne.s32.totalorder %s106, %s107
      %p118 = scmp.eq.s32.totalorder %s14, 0
      %p119 = por %p117, %p118
      %p120 = scmp.ne.s32.totalorder %s106, %s107
      %p121 = scmp.eq.s32.totalorder %s15, 3
      %p122 = por %p120, %p121
      %p124 = scmp.ne.s32.totalorder %s107, %s123
      %p125 = scmp.eq.s32.totalorder %s15, 0
      %p126 = por %p124, %p125
      %p127 = scmp.le.s32.totalorder 1, %s9
      %p128 = scmp.lt.s32.totalorder %s9, 5
      %p129 = pnand %p127, %p128
      %p130 = pneg %p129
      // Predicated region
      $region9: #{conv3x3_relu_pallas.1} parent=5 // pred_check
        _
      $region10: #{conv3x3_relu_pallas.1} parent=5 // pred_check_branch
        %132 = sbr.rel (%p129) target = $region12
      $region11: #{conv3x3_relu_pallas.1} parent=5 // pred_region
        %s133 = ssub.s32 %s9, 1
        // Predicated region
        $region13: #{conv3x3_relu_pallas.1} parent=11 // pred_check
          %p134 = pneg %p70
        $region14: #{conv3x3_relu_pallas.1} parent=11 // pred_check_branch
          %136 = sbr.rel (%p134) target = $region16
        $region15: #{conv3x3_relu_pallas.1} parent=11 // pred_region
          _
        $region16: #{conv3x3_relu_pallas.1} parent=11 // pred_fallthru
          _
        // Predicated region
        $region17: #{conv3x3_relu_pallas.1} parent=11 // pred_check
          %p137 = pneg %p91
        $region18: #{conv3x3_relu_pallas.1} parent=11 // pred_check_branch
          %139 = sbr.rel (%p137) target = $region20
        $region19: #{conv3x3_relu_pallas.1} parent=11 // pred_region
          _
        $region20: #{conv3x3_relu_pallas.1} parent=11 // pred_fallthru
          _
      $region12: #{conv3x3_relu_pallas.1} parent=5 // pred_fallthru
        _
      %p140 = scmp.lt.s32.totalorder %s9, 4
      // Predicated region
      $region21: #{conv3x3_relu_pallas.1} parent=5 // pred_check
        %p141 = pneg %p140
      $region22: #{conv3x3_relu_pallas.1} parent=5 // pred_check_branch
        %143 = sbr.rel (%p141) target = $region24
      $region23: #{conv3x3_relu_pallas.1} parent=5 // pred_region
        // Predicated region
        $region25: #{conv3x3_relu_pallas.1} parent=23 // pred_check
          %p144 = pneg %p43
        $region26: #{conv3x3_relu_pallas.1} parent=23 // pred_check_branch
          %146 = sbr.rel (%p144) target = $region28
        $region27: #{conv3x3_relu_pallas.1} parent=23 // pred_region
          %p147 = scmp.lt.s32.totalorder %s16, 1
          %s148 = scalar_select %p147, %s16, 1
          %p149 = scmp.lt.s32.totalorder %s17, 1
          %s150 = scalar_select %p149, %s17, 1
          %s151 = smul.addr %s150, 2
          %s152 = smul.addr %s148, 4
          %s153 = sadd.s32 %s151, %s152
          %s154 = scalar_lea.vmem %s0, %s153
        $region28: #{conv3x3_relu_pallas.1} parent=23 // pred_fallthru
          _
      $region24: #{conv3x3_relu_pallas.1} parent=5 // pred_fallthru
        _
      %p155 = scmp.le.s32.totalorder 1, %s9
      %p156 = scmp.lt.s32.totalorder %s9, 5
      %p157 = pnand %p155, %p156
      %p158 = pneg %p157
      // Predicated region
      $region29: #{conv3x3_relu_pallas.1} parent=5 // pred_check
        _
      $region30: #{conv3x3_relu_pallas.1} parent=5 // pred_check_branch
        %160 = sbr.rel (%p157) target = $region32
      $region31: #{conv3x3_relu_pallas.1} parent=5 // pred_region
        %s161 = ssub.s32 %s9, 1
        %p162 = scmp.lt.s32.totalorder %s18, 1
        %s163 = scalar_select %p162, %s18, 1
        %p164 = scmp.lt.s32.totalorder %s19, 1
        %s165 = scalar_select %p164, %s19, 1
        %s166 = smul.addr %s165, 2
        %s167 = smul.addr %s163, 4
        %s168 = sadd.s32 %s166, %s167
        %s169 = scalar_lea.vmem %s0, %s168
        %p170 = pneg %p49
        %p171 = pneg %p46
        %p172 = pneg %p70
        %p173 = pneg %p67
        %p174 = pneg %p91
        %p175 = pneg %p88
        %p176 = pneg %p119
        %p177 = pneg %p116
        %s178 = sand.u32 %s106, 1
        %s179 = sand.u32 %s106, 1
        %s180 = smul.addr %s179, 256
        %s181 = scalar_lea.vmem [#allocation2], %s180
        %p182 = scmp.lt.s32.totalorder %s18, 1
        %s183 = scalar_select %p182, %s18, 1
        %p184 = scmp.lt.s32.totalorder %s19, 1
        %s185 = scalar_select %p184, %s19, 1
        %s186 = smul.addr %s185, 2
        %s187 = smul.addr %s183, 4
        %s188 = sadd.s32 %s186, %s187
        %s189 = scalar_lea.vmem %s0, %s188
        %v190 = vld [vmem:[%s189] sm:$0x3]
        %v192 = vlaneseq
        %v193 = vshrl.u32 %v192, 7
        %v194 = vsub.s32 0, %v193
        %v195 = vrot.slane %v190, %v194
        %v196 = vlaneseq
        %v197 = vshrl.u32 %v196, 7
        %v198 = vsub.s32 1, %v197
        %v199 = vrot.slane %v190, %v198
        %202 = vrot.lane.b32.xlu0 %v195, 127
        %v203 = vpop.permute.xlu0 %202
        %204 = vrot.lane.b32.xlu0 %v199, 127
        %v205 = vpop.permute.xlu0 %204
        %vm206 = vcmask 1039360
        %v207 = vsel %vm206, %v203, %v205
        %210 = vrot.lane.b32.xlu0 %v195, 126
        %v211 = vpop.permute.xlu0 %210
        %212 = vrot.lane.b32.xlu0 %v199, 126
        %v213 = vpop.permute.xlu0 %212
        %vm214 = vcmask 1031168
        %v215 = vsel %vm214, %v211, %v213
        %218 = vrot.lane.b32.xlu0 %v195, 110
        %v219 = vpop.permute.xlu0 %218
        %220 = vrot.lane.b32.xlu0 %v199, 110
        %v221 = vpop.permute.xlu0 %220
        %vm222 = vcmask 900096
        %v223 = vsel %vm222, %v219, %v221
        %226 = vrot.lane.b32.xlu0 %v195, 109
        %v227 = vpop.permute.xlu0 %226
        %228 = vrot.lane.b32.xlu0 %v199, 109
        %v229 = vpop.permute.xlu0 %228
        %vm230 = vcmask 891904
        %v231 = vsel %vm230, %v227, %v229
        %234 = vrot.lane.b32.xlu0 %v195, 108
        %v235 = vpop.permute.xlu0 %234
        %236 = vrot.lane.b32.xlu0 %v199, 108
        %v237 = vpop.permute.xlu0 %236
        %vm238 = vcmask 883712
        %v239 = vsel %vm238, %v235, %v237
        %242 = vrot.lane.b32.xlu0 %v195, 92
        %v243 = vpop.permute.xlu0 %242
        %244 = vrot.lane.b32.xlu0 %v199, 92
        %v245 = vpop.permute.xlu0 %244
        %vm246 = vcmask 752640
        %v247 = vsel %vm246, %v243, %v245
        %250 = vrot.lane.b32.xlu0 %v195, 91
        %v251 = vpop.permute.xlu0 %250
        %252 = vrot.lane.b32.xlu0 %v199, 91
        %v253 = vpop.permute.xlu0 %252
        %vm254 = vcmask 744448
        %v255 = vsel %vm254, %v251, %v253
        %258 = vrot.lane.b32.xlu0 %v195, 90
        %v259 = vpop.permute.xlu0 %258
        %260 = vrot.lane.b32.xlu0 %v199, 90
        %v261 = vpop.permute.xlu0 %260
        %vm262 = vcmask 736256
        %v263 = vsel %vm262, %v259, %v261
        %vm264 = vcmask 1040384
        %v265 = vsel %vm264, %v195, %v207
        %v266 = vsel %vm264, %v199, %v205
        %vm267 = vcmask 1041408
        %v268 = vsel %vm267, %v265, %v215
        %v269 = vsel %vm267, %v266, %v213
        %vm270 = vcmask 1042432
        %v271 = vsel %vm270, %v268, %v223
        %v272 = vsel %vm270, %v269, %v221
        %vm273 = vcmask 1043456
        %v274 = vsel %vm273, %v271, %v231
        %v275 = vsel %vm273, %v272, %v229
        %vm276 = vcmask 1044480
        %v277 = vsel %vm276, %v274, %v239
        %v278 = vsel %vm276, %v275, %v237
        %vm279 = vcmask 1045504
        %v280 = vsel %vm279, %v277, %v247
        %v281 = vsel %vm279, %v278, %v245
        %vm282 = vcmask 1046528
        %v283 = vsel %vm282, %v280, %v255
        %v284 = vsel %vm282, %v281, %v253
        %v285 = vld [vmem:[%s1] sm:$0xff]
        %v286 = vld [vmem:[%s1 + $0x8] sm:$0xff]
        %v287 = vld [vmem:[%s1 + $0x10] sm:$0xff]
        %v288 = vld [vmem:[%s1 + $0x18] sm:$0xff]
        %v289 = vld [vmem:[%s2] sm:$0xff]
        %v290 = vld [vmem:[%s2 + $0x8] sm:$0xff]
        %v291 = vld [vmem:[%s2 + $0x10] sm:$0xff]
        %v292 = vld [vmem:[%s2 + $0x18] sm:$0xff]
        %294 = vset.pattern.permute.xlu0 0
        %295 = vperm.xlu0 %294, %v289
        %v296 = vpop.permute.xlu0 %295
        %299 = vset.pattern.permute.xlu0 0
        %300 = vperm.xlu0 %299, %v290
        %v301 = vpop.permute.xlu0 %300
        %304 = vset.pattern.permute.xlu0 0
        %305 = vperm.xlu0 %304, %v291
        %v306 = vpop.permute.xlu0 %305
        %309 = vset.pattern.permute.xlu0 0
        %310 = vperm.xlu0 %309, %v292
        %v311 = vpop.permute.xlu0 %310
        %vm313 = vcmask 72704
        %v315 = vsel %vm313, %v285, 0
        %v318 = vsel %vm313, %v286, 0
        %v321 = vsel %vm313, %v287, 0
        %v324 = vsel %vm313, %v288, 0
        %v326 = vsel %vm264, %v263, 0
        %v328 = vsel %vm264, %v261, 0
        %330 = vmatprep.subr.mxu0 %v284
        %331 = vmatpush1.msra.mxu0 %v283
        %332 = vmatprep.subr.mxu0 %v328
        %333 = vmatpush1.msra.mxu0 %v326
        %334 = vmatprep.subr.mxu0 0.0
        %335 = vmatpush1.msra.mxu0 0.0
        %336 = vmatprep.subr.mxu0 0.0
        %337 = vmatpush1.msra.mxu0 0.0
        %338 = vmatprep.subr.mxu0 0.0
        %339 = vmatpush1.msra.mxu0 0.0
        %340 = vmatprep.subr.mxu0 0.0
        %341 = vmatpush1.msra.mxu0 0.0
        %342 = vmatprep.subr.mxu0 0.0
        %343 = vmatpush1.msra.mxu0 0.0
        %344 = vmatprep.subr.mxu0 0.0
        %345 = vmatpush1.msra.mxu0 0.0
        %346 = vmatprep.subr.mxu0 0.0
        %347 = vmatpush1.msra.mxu0 0.0
        %348 = vmatprep.subr.mxu0 0.0
        %349 = vmatpush1.msra.mxu0 0.0
        %350 = vmatprep.subr.mxu0 0.0
        %351 = vmatpush1.msra.mxu0 0.0
        %352 = vmatprep.subr.mxu0 0.0
        %353 = vmatpush1.msra.mxu0 0.0
        %354 = vmatprep.subr.mxu0 0.0
        %355 = vmatpush1.msra.mxu0 0.0
        %356 = vmatprep.subr.mxu0 0.0
        %357 = vmatpush1.msra.mxu0 0.0
        %358 = vmatprep.subr.mxu0 0.0
        %359 = vmatpush1.msra.mxu0 0.0
        %360 = vmatprep.subr.mxu0 0.0
        %361 = vmatpush1.msra.mxu0 0.0
        %362 = vmatprep.subr.mxu0 0.0
        %363 = vmatpush1.msra.mxu0 0.0
        %364 = vmatprep.subr.mxu0 0.0
        %365 = vmatpush1.msra.mxu0 0.0
        %366 = vmatprep.subr.mxu0 0.0
        %367 = vmatpush1.msra.mxu0 0.0
        %368 = vmatprep.subr.mxu0 0.0
        %369 = vmatpush1.msra.mxu0 0.0
        %370 = vmatprep.subr.mxu0 0.0
        %371 = vmatpush1.msra.mxu0 0.0
        %372 = vmatprep.subr.mxu0 0.0
        %373 = vmatpush1.msra.mxu0 0.0
        %374 = vmatprep.subr.mxu0 0.0
        %375 = vmatpush1.msra.mxu0 0.0
        %376 = vmatprep.subr.mxu0 0.0
        %377 = vmatpush1.msra.mxu0 0.0
        %378 = vmatprep.subr.mxu0 0.0
        %379 = vmatpush1.msra.mxu0 0.0
        %380 = vmatprep.subr.mxu0 0.0
        %381 = vmatpush1.msra.mxu0 0.0
        %382 = vmatprep.subr.mxu0 0.0
        %383 = vmatpush1.msra.mxu0 0.0
        %384 = vmatprep.subr.mxu0 0.0
        %385 = vmatpush1.msra.mxu0 0.0
        %386 = vmatprep.subr.mxu0 0.0
        %387 = vmatpush1.msra.mxu0 0.0
        %388 = vmatprep.subr.mxu0 0.0
        %389 = vmatpush1.msra.mxu0 0.0
        %390 = vmatprep.subr.mxu0 0.0
        %391 = vmatpush1.msra.mxu0 0.0
        %392 = vmatprep.subr.mxu0 0.0
        %393 = vmatpush1.msra.mxu0 0.0
        %394 = vmatprep.mubr.f32.mxu0 0.0
        %395 = vmatmul.mubr.f32.gmra.mrb[0].mxu0 %v315
        %v396 = vpop.f32.mrb[0].mxu0
        %v397 = vadd.f32 %v296, %v396
        %v398 = vpop.f32.mrb[0].mxu0
        %v399 = vadd.f32 %v296, %v398
        %400 = vmatprep.mubr.f32.mxu0 0.0
        %401 = vmatmul.mubr.f32.gmra.mrb[0].mxu0 %v318
        %v402 = vpop.f32.mrb[0].mxu0
        %v403 = vadd.f32 %v301, %v402
        %v404 = vpop.f32.mrb[0].mxu0
        %v405 = vadd.f32 %v301, %v404
        %406 = vmatprep.mubr.f32.mxu0 0.0
        %407 = vmatmul.mubr.f32.gmra.mrb[0].mxu0 %v321
        %v408 = vpop.f32.mrb[0].mxu0
        %v409 = vadd.f32 %v306, %v408
        %v410 = vpop.f32.mrb[0].mxu0
        %v411 = vadd.f32 %v306, %v410
        %412 = vmatprep.mubr.f32.mxu0 0.0
        %413 = vmatmul.mubr.f32.gmra.mrb[0].mxu0 %v324
        %v414 = vpop.f32.mrb[0].mxu0
        %v415 = vadd.f32 %v311, %v414
        %v416 = vpop.f32.mrb[0].mxu0
        %v417 = vadd.f32 %v311, %v416
        %418 = vdwg.mxu0
        %v419 = vmax.f32 %v397, 0.0
        %v420 = vmax.f32 %v399, 0.0
        %v421 = vmax.f32 %v403, 0.0
        %v422 = vmax.f32 %v405, 0.0
        %v423 = vmax.f32 %v409, 0.0
        %v424 = vmax.f32 %v411, 0.0
        %v425 = vmax.f32 %v415, 0.0
        %v426 = vmax.f32 %v417, 0.0
        %v431 = vcombine.high %v419, %v419
        %v433 = vunpack.c.l.s4 1966171168
        %v434 = vunpack.c.0.s8 %v433
        %v435 = vlaneseq
        %v436 = vshrl.u32 %v435, 7
        %v437 = vsub.s32 %v434, %v436
        %v438 = vrot.slane %v419, %v437
        %v440 = vunpack.c.l.s4 1966171168
        %v441 = vunpack.c.0.s8 %v440
        %v442 = vlaneseq
        %v443 = vshrl.u32 %v442, 7
        %v444 = vsub.s32 %v441, %v443
        %v445 = vrot.slane %v431, %v444
        %v446 = vcombine.high %v438, %v438
        %v447 = vcombine.high %v445, %v445
        %v449 = vunpack.c.l.s4 1966171168
        %v450 = vunpack.c.0.s8 %v449
        %v451 = vlaneseq
        %v452 = vshrl.u32 %v451, 7
        %v453 = vsub.s32 %v450, %v452
        %v454 = vrot.slane %v438, %v453
        %v456 = vunpack.c.l.s4 1966171168
        %v457 = vunpack.c.0.s8 %v456
        %v458 = vlaneseq
        %v459 = vshrl.u32 %v458, 7
        %v460 = vsub.s32 %v457, %v459
        %v461 = vrot.slane %v445, %v460
        %v463 = vunpack.c.l.s4 1966171168
        %v464 = vunpack.c.0.s8 %v463
        %v465 = vlaneseq
        %v466 = vshrl.u32 %v465, 7
        %v467 = vsub.s32 %v464, %v466
        %v468 = vrot.slane %v446, %v467
        %v470 = vunpack.c.l.s4 1966171168
        %v471 = vunpack.c.0.s8 %v470
        %v472 = vlaneseq
        %v473 = vshrl.u32 %v472, 7
        %v474 = vsub.s32 %v471, %v473
        %v475 = vrot.slane %v447, %v474
        %v476 = vcombine.high %v454, %v454
        %v477 = vcombine.high %v461, %v461
        %v478 = vcombine.high %v468, %v468
        %v479 = vcombine.high %v475, %v475
        %v480 = vcombine.high %v421, %v421
        %v482 = vunpack.c.l.s4 1966171168
        %v483 = vunpack.c.0.s8 %v482
        %v484 = vlaneseq
        %v485 = vshrl.u32 %v484, 7
        %v486 = vsub.s32 %v483, %v485
        %v487 = vrot.slane %v421, %v486
        %v489 = vunpack.c.l.s4 1966171168
        %v490 = vunpack.c.0.s8 %v489
        %v491 = vlaneseq
        %v492 = vshrl.u32 %v491, 7
        %v493 = vsub.s32 %v490, %v492
        %v494 = vrot.slane %v480, %v493
        %v495 = vcombine.high %v487, %v487
        %v496 = vcombine.high %v494, %v494
        %v498 = vunpack.c.l.s4 1966171168
        %v499 = vunpack.c.0.s8 %v498
        %v500 = vlaneseq
        %v501 = vshrl.u32 %v500, 7
        %v502 = vsub.s32 %v499, %v501
        %v503 = vrot.slane %v487, %v502
        %v505 = vunpack.c.l.s4 1966171168
        %v506 = vunpack.c.0.s8 %v505
        %v507 = vlaneseq
        %v508 = vshrl.u32 %v507, 7
        %v509 = vsub.s32 %v506, %v508
        %v510 = vrot.slane %v494, %v509
        %v512 = vunpack.c.l.s4 1966171168
        %v513 = vunpack.c.0.s8 %v512
        %v514 = vlaneseq
        %v515 = vshrl.u32 %v514, 7
        %v516 = vsub.s32 %v513, %v515
        %v517 = vrot.slane %v495, %v516
        %v519 = vunpack.c.l.s4 1966171168
        %v520 = vunpack.c.0.s8 %v519
        %v521 = vlaneseq
        %v522 = vshrl.u32 %v521, 7
        %v523 = vsub.s32 %v520, %v522
        %v524 = vrot.slane %v496, %v523
        %v525 = vcombine.high %v503, %v503
        %v526 = vcombine.high %v510, %v510
        %v527 = vcombine.high %v517, %v517
        %v528 = vcombine.high %v524, %v524
        %v529 = vcombine.high %v423, %v423
        %v531 = vunpack.c.l.s4 1966171168
        %v532 = vunpack.c.0.s8 %v531
        %v533 = vlaneseq
        %v534 = vshrl.u32 %v533, 7
        %v535 = vsub.s32 %v532, %v534
        %v536 = vrot.slane %v423, %v535
        %v538 = vunpack.c.l.s4 1966171168
        %v539 = vunpack.c.0.s8 %v538
        %v540 = vlaneseq
        %v541 = vshrl.u32 %v540, 7
        %v542 = vsub.s32 %v539, %v541
        %v543 = vrot.slane %v529, %v542
        %v544 = vcombine.high %v536, %v536
        %v545 = vcombine.high %v543, %v543
        %v547 = vunpack.c.l.s4 1966171168
        %v548 = vunpack.c.0.s8 %v547
        %v549 = vlaneseq
        %v550 = vshrl.u32 %v549, 7
        %v551 = vsub.s32 %v548, %v550
        %v552 = vrot.slane %v536, %v551
        %v554 = vunpack.c.l.s4 1966171168
        %v555 = vunpack.c.0.s8 %v554
        %v556 = vlaneseq
        %v557 = vshrl.u32 %v556, 7
        %v558 = vsub.s32 %v555, %v557
        %v559 = vrot.slane %v543, %v558
        %v561 = vunpack.c.l.s4 1966171168
        %v562 = vunpack.c.0.s8 %v561
        %v563 = vlaneseq
        %v564 = vshrl.u32 %v563, 7
        %v565 = vsub.s32 %v562, %v564
        %v566 = vrot.slane %v544, %v565
        %v568 = vunpack.c.l.s4 1966171168
        %v569 = vunpack.c.0.s8 %v568
        %v570 = vlaneseq
        %v571 = vshrl.u32 %v570, 7
        %v572 = vsub.s32 %v569, %v571
        %v573 = vrot.slane %v545, %v572
        %v574 = vcombine.high %v552, %v552
        %v575 = vcombine.high %v559, %v559
        %v576 = vcombine.high %v566, %v566
        %v577 = vcombine.high %v573, %v573
        %v578 = vcombine.high %v425, %v425
        %v580 = vunpack.c.l.s4 1966171168
        %v581 = vunpack.c.0.s8 %v580
        %v582 = vlaneseq
        %v583 = vshrl.u32 %v582, 7
        %v584 = vsub.s32 %v581, %v583
        %v585 = vrot.slane %v425, %v584
        %v587 = vunpack.c.l.s4 1966171168
        %v588 = vunpack.c.0.s8 %v587
        %v589 = vlaneseq
        %v590 = vshrl.u32 %v589, 7
        %v591 = vsub.s32 %v588, %v590
        %v592 = vrot.slane %v578, %v591
        %v593 = vcombine.high %v585, %v585
        %v594 = vcombine.high %v592, %v592
        %v596 = vunpack.c.l.s4 1966171168
        %v597 = vunpack.c.0.s8 %v596
        %v598 = vlaneseq
        %v599 = vshrl.u32 %v598, 7
        %v600 = vsub.s32 %v597, %v599
        %v601 = vrot.slane %v585, %v600
        %v603 = vunpack.c.l.s4 1966171168
        %v604 = vunpack.c.0.s8 %v603
        %v605 = vlaneseq
        %v606 = vshrl.u32 %v605, 7
        %v607 = vsub.s32 %v604, %v606
        %v608 = vrot.slane %v592, %v607
        %v610 = vunpack.c.l.s4 1966171168
        %v611 = vunpack.c.0.s8 %v610
        %v612 = vlaneseq
        %v613 = vshrl.u32 %v612, 7
        %v614 = vsub.s32 %v611, %v613
        %v615 = vrot.slane %v593, %v614
        %v617 = vunpack.c.l.s4 1966171168
        %v618 = vunpack.c.0.s8 %v617
        %v619 = vlaneseq
        %v620 = vshrl.u32 %v619, 7
        %v621 = vsub.s32 %v618, %v620
        %v622 = vrot.slane %v594, %v621
        %v623 = vcombine.high %v601, %v601
        %v624 = vcombine.high %v608, %v608
        %v625 = vcombine.high %v615, %v615
        %v626 = vcombine.high %v622, %v622
        %vm659 = vcmask 122880
        %660 = vst.msk [vmem:[%s181] sm:$0x1] %vm659, %v454
        %661 = vst.msk [vmem:[%s181 + $0x8] sm:$0x1] %vm659, %v468
        %662 = vst.msk [vmem:[%s181 + $0x10] sm:$0x1] %vm659, %v476
        %663 = vst.msk [vmem:[%s181 + $0x18] sm:$0x1] %vm659, %v478
        %664 = vst.msk [vmem:[%s181 + $0x20] sm:$0x1] %vm659, %v461
        %665 = vst.msk [vmem:[%s181 + $0x28] sm:$0x1] %vm659, %v475
        %666 = vst.msk [vmem:[%s181 + $0x30] sm:$0x1] %vm659, %v477
        %667 = vst.msk [vmem:[%s181 + $0x38] sm:$0x1] %vm659, %v479
        %668 = vst.msk [vmem:[%s181 + $0x40] sm:$0x1] %vm659, %v503
        %669 = vst.msk [vmem:[%s181 + $0x48] sm:$0x1] %vm659, %v517
        %670 = vst.msk [vmem:[%s181 + $0x50] sm:$0x1] %vm659, %v525
        %671 = vst.msk [vmem:[%s181 + $0x58] sm:$0x1] %vm659, %v527
        %672 = vst.msk [vmem:[%s181 + $0x60] sm:$0x1] %vm659, %v510
        %673 = vst.msk [vmem:[%s181 + $0x68] sm:$0x1] %vm659, %v524
        %674 = vst.msk [vmem:[%s181 + $0x70] sm:$0x1] %vm659, %v526
        %675 = vst.msk [vmem:[%s181 + $0x78] sm:$0x1] %vm659, %v528
        %676 = vst.msk [vmem:[%s181 + $0x80] sm:$0x1] %vm659, %v552
        %677 = vst.msk [vmem:[%s181 + $0x88] sm:$0x1] %vm659, %v566
        %678 = vst.msk [vmem:[%s181 + $0x90] sm:$0x1] %vm659, %v574
        %679 = vst.msk [vmem:[%s181 + $0x98] sm:$0x1] %vm659, %v576
        %680 = vst.msk [vmem:[%s181 + $0xa0] sm:$0x1] %vm659, %v559
        %681 = vst.msk [vmem:[%s181 + $0xa8] sm:$0x1] %vm659, %v573
        %682 = vst.msk [vmem:[%s181 + $0xb0] sm:$0x1] %vm659, %v575
        %683 = vst.msk [vmem:[%s181 + $0xb8] sm:$0x1] %vm659, %v577
        %684 = vst.msk [vmem:[%s181 + $0xc0] sm:$0x1] %vm659, %v601
        %685 = vst.msk [vmem:[%s181 + $0xc8] sm:$0x1] %vm659, %v615
        %686 = vst.msk [vmem:[%s181 + $0xd0] sm:$0x1] %vm659, %v623
        %687 = vst.msk [vmem:[%s181 + $0xd8] sm:$0x1] %vm659, %v625
        %688 = vst.msk [vmem:[%s181 + $0xe0] sm:$0x1] %vm659, %v608
        %689 = vst.msk [vmem:[%s181 + $0xe8] sm:$0x1] %vm659, %v622
        %690 = vst.msk [vmem:[%s181 + $0xf0] sm:$0x1] %vm659, %v624
        %691 = vst.msk [vmem:[%s181 + $0xf8] sm:$0x1] %vm659, %v626
        %v692 = vlaneseq
        %v693 = vshrl.u32 %v692, 7
        %v694 = vsub.s32 0, %v693
        %v695 = vrot.slane %v454, %v694
        %v696 = vlaneseq
        %v697 = vshrl.u32 %v696, 7
        %v698 = vsub.s32 0, %v697
        %v699 = vrot.slane %v468, %v698
        %v700 = vlaneseq
        %v701 = vshrl.u32 %v700, 7
        %v702 = vsub.s32 0, %v701
        %v703 = vrot.slane %v476, %v702
        %v704 = vlaneseq
        %v705 = vshrl.u32 %v704, 7
        %v706 = vsub.s32 0, %v705
        %v707 = vrot.slane %v478, %v706
        %v708 = vlaneseq
        %v709 = vshrl.u32 %v708, 7
        %v710 = vsub.s32 0, %v709
        %v711 = vrot.slane %v461, %v710
        %v712 = vlaneseq
        %v713 = vshrl.u32 %v712, 7
        %v714 = vsub.s32 0, %v713
        %v715 = vrot.slane %v475, %v714
        %v716 = vlaneseq
        %v717 = vshrl.u32 %v716, 7
        %v718 = vsub.s32 0, %v717
        %v719 = vrot.slane %v477, %v718
        %v720 = vlaneseq
        %v721 = vshrl.u32 %v720, 7
        %v722 = vsub.s32 0, %v721
        %v723 = vrot.slane %v479, %v722
        %v724 = vlaneseq
        %v725 = vshrl.u32 %v724, 7
        %v726 = vsub.s32 0, %v725
        %v727 = vrot.slane %v503, %v726
        %v728 = vlaneseq
        %v729 = vshrl.u32 %v728, 7
        %v730 = vsub.s32 0, %v729
        %v731 = vrot.slane %v517, %v730
        %v732 = vlaneseq
        %v733 = vshrl.u32 %v732, 7
        %v734 = vsub.s32 0, %v733
        %v735 = vrot.slane %v525, %v734
        %v736 = vlaneseq
        %v737 = vshrl.u32 %v736, 7
        %v738 = vsub.s32 0, %v737
        %v739 = vrot.slane %v527, %v738
        %v740 = vlaneseq
        %v741 = vshrl.u32 %v740, 7
        %v742 = vsub.s32 0, %v741
        %v743 = vrot.slane %v510, %v742
        %v744 = vlaneseq
        %v745 = vshrl.u32 %v744, 7
        %v746 = vsub.s32 0, %v745
        %v747 = vrot.slane %v524, %v746
        %v748 = vlaneseq
        %v749 = vshrl.u32 %v748, 7
        %v750 = vsub.s32 0, %v749
        %v751 = vrot.slane %v526, %v750
        %v752 = vlaneseq
        %v753 = vshrl.u32 %v752, 7
        %v754 = vsub.s32 0, %v753
        %v755 = vrot.slane %v528, %v754
        %v756 = vlaneseq
        %v757 = vshrl.u32 %v756, 7
        %v758 = vsub.s32 0, %v757
        %v759 = vrot.slane %v552, %v758
        %v760 = vlaneseq
        %v761 = vshrl.u32 %v760, 7
        %v762 = vsub.s32 0, %v761
        %v763 = vrot.slane %v566, %v762
        %v764 = vlaneseq
        %v765 = vshrl.u32 %v764, 7
        %v766 = vsub.s32 0, %v765
        %v767 = vrot.slane %v574, %v766
        %v768 = vlaneseq
        %v769 = vshrl.u32 %v768, 7
        %v770 = vsub.s32 0, %v769
        %v771 = vrot.slane %v576, %v770
        %v772 = vlaneseq
        %v773 = vshrl.u32 %v772, 7
        %v774 = vsub.s32 0, %v773
        %v775 = vrot.slane %v559, %v774
        %v776 = vlaneseq
        %v777 = vshrl.u32 %v776, 7
        %v778 = vsub.s32 0, %v777
        %v779 = vrot.slane %v573, %v778
        %v780 = vlaneseq
        %v781 = vshrl.u32 %v780, 7
        %v782 = vsub.s32 0, %v781
        %v783 = vrot.slane %v575, %v782
        %v784 = vlaneseq
        %v785 = vshrl.u32 %v784, 7
        %v786 = vsub.s32 0, %v785
        %v787 = vrot.slane %v577, %v786
        %v788 = vlaneseq
        %v789 = vshrl.u32 %v788, 7
        %v790 = vsub.s32 0, %v789
        %v791 = vrot.slane %v601, %v790
        %v792 = vlaneseq
        %v793 = vshrl.u32 %v792, 7
        %v794 = vsub.s32 0, %v793
        %v795 = vrot.slane %v615, %v794
        %v796 = vlaneseq
        %v797 = vshrl.u32 %v796, 7
        %v798 = vsub.s32 0, %v797
        %v799 = vrot.slane %v623, %v798
        %v800 = vlaneseq
        %v801 = vshrl.u32 %v800, 7
        %v802 = vsub.s32 0, %v801
        %v803 = vrot.slane %v625, %v802
        %v804 = vlaneseq
        %v805 = vshrl.u32 %v804, 7
        %v806 = vsub.s32 0, %v805
        %v807 = vrot.slane %v608, %v806
        %v808 = vlaneseq
        %v809 = vshrl.u32 %v808, 7
        %v810 = vsub.s32 0, %v809
        %v811 = vrot.slane %v622, %v810
        %v812 = vlaneseq
        %v813 = vshrl.u32 %v812, 7
        %v814 = vsub.s32 0, %v813
        %v815 = vrot.slane %v624, %v814
        %v816 = vlaneseq
        %v817 = vshrl.u32 %v816, 7
        %v818 = vsub.s32 0, %v817
        %v819 = vrot.slane %v626, %v818
        %820 = vrot.lane.b32.xlu0 %v695, 110
        %v821 = vpop.permute.xlu0 %820
        %822 = vrot.lane.b32.xlu0 %v699, 110
        %v823 = vpop.permute.xlu0 %822
        %824 = vrot.lane.b32.xlu0 %v703, 110
        %v825 = vpop.permute.xlu0 %824
        %826 = vrot.lane.b32.xlu0 %v707, 110
        %v827 = vpop.permute.xlu0 %826
        %828 = vrot.lane.b32.xlu0 %v711, 110
        %v829 = vpop.permute.xlu0 %828
        %830 = vrot.lane.b32.xlu0 %v715, 110
        %v831 = vpop.permute.xlu0 %830
        %832 = vrot.lane.b32.xlu0 %v719, 110
        %v833 = vpop.permute.xlu0 %832
        %834 = vrot.lane.b32.xlu0 %v723, 110
        %v835 = vpop.permute.xlu0 %834
        %836 = vrot.lane.b32.xlu0 %v727, 110
        %v837 = vpop.permute.xlu0 %836
        %838 = vrot.lane.b32.xlu0 %v731, 110
        %v839 = vpop.permute.xlu0 %838
        %840 = vrot.lane.b32.xlu0 %v735, 110
        %v841 = vpop.permute.xlu0 %840
        %842 = vrot.lane.b32.xlu0 %v739, 110
        %v843 = vpop.permute.xlu0 %842
        %844 = vrot.lane.b32.xlu0 %v743, 110
        %v845 = vpop.permute.xlu0 %844
        %846 = vrot.lane.b32.xlu0 %v747, 110
        %v847 = vpop.permute.xlu0 %846
        %848 = vrot.lane.b32.xlu0 %v751, 110
        %v849 = vpop.permute.xlu0 %848
        %850 = vrot.lane.b32.xlu0 %v755, 110
        %v851 = vpop.permute.xlu0 %850
        %852 = vrot.lane.b32.xlu0 %v759, 110
        %v853 = vpop.permute.xlu0 %852
        %854 = vrot.lane.b32.xlu0 %v763, 110
        %v855 = vpop.permute.xlu0 %854
        %856 = vrot.lane.b32.xlu0 %v767, 110
        %v857 = vpop.permute.xlu0 %856
        %858 = vrot.lane.b32.xlu0 %v771, 110
        %v859 = vpop.permute.xlu0 %858
        %860 = vrot.lane.b32.xlu0 %v775, 110
        %v861 = vpop.permute.xlu0 %860
        %862 = vrot.lane.b32.xlu0 %v779, 110
        %v863 = vpop.permute.xlu0 %862
        %864 = vrot.lane.b32.xlu0 %v783, 110
        %v865 = vpop.permute.xlu0 %864
        %866 = vrot.lane.b32.xlu0 %v787, 110
        %v867 = vpop.permute.xlu0 %866
        %868 = vrot.lane.b32.xlu0 %v791, 110
        %v869 = vpop.permute.xlu0 %868
        %870 = vrot.lane.b32.xlu0 %v795, 110
        %v871 = vpop.permute.xlu0 %870
        %872 = vrot.lane.b32.xlu0 %v799, 110
        %v873 = vpop.permute.xlu0 %872
        %874 = vrot.lane.b32.xlu0 %v803, 110
        %v875 = vpop.permute.xlu0 %874
        %876 = vrot.lane.b32.xlu0 %v807, 110
        %v877 = vpop.permute.xlu0 %876
        %878 = vrot.lane.b32.xlu0 %v811, 110
        %v879 = vpop.permute.xlu0 %878
        %880 = vrot.lane.b32.xlu0 %v815, 110
        %v881 = vpop.permute.xlu0 %880
        %882 = vrot.lane.b32.xlu0 %v819, 110
        %v883 = vpop.permute.xlu0 %882
        %916 = vst.msk [vmem:[%s181 + $0x1] sm:$0x1] %vm659, %v821
        %917 = vst.msk [vmem:[%s181 + $0x9] sm:$0x1] %vm659, %v823
        %918 = vst.msk [vmem:[%s181 + $0x11] sm:$0x1] %vm659, %v825
        %919 = vst.msk [vmem:[%s181 + $0x19] sm:$0x1] %vm659, %v827
        %920 = vst.msk [vmem:[%s181 + $0x21] sm:$0x1] %vm659, %v829
        %921 = vst.msk [vmem:[%s181 + $0x29] sm:$0x1] %vm659, %v831
        %922 = vst.msk [vmem:[%s181 + $0x31] sm:$0x1] %vm659, %v833
        %923 = vst.msk [vmem:[%s181 + $0x39] sm:$0x1] %vm659, %v835
        %924 = vst.msk [vmem:[%s181 + $0x41] sm:$0x1] %vm659, %v837
        %925 = vst.msk [vmem:[%s181 + $0x49] sm:$0x1] %vm659, %v839
        %926 = vst.msk [vmem:[%s181 + $0x51] sm:$0x1] %vm659, %v841
        %927 = vst.msk [vmem:[%s181 + $0x59] sm:$0x1] %vm659, %v843
        %928 = vst.msk [vmem:[%s181 + $0x61] sm:$0x1] %vm659, %v845
        %929 = vst.msk [vmem:[%s181 + $0x69] sm:$0x1] %vm659, %v847
        %930 = vst.msk [vmem:[%s181 + $0x71] sm:$0x1] %vm659, %v849
        %931 = vst.msk [vmem:[%s181 + $0x79] sm:$0x1] %vm659, %v851
        %932 = vst.msk [vmem:[%s181 + $0x81] sm:$0x1] %vm659, %v853
        %933 = vst.msk [vmem:[%s181 + $0x89] sm:$0x1] %vm659, %v855
        %934 = vst.msk [vmem:[%s181 + $0x91] sm:$0x1] %vm659, %v857
        %935 = vst.msk [vmem:[%s181 + $0x99] sm:$0x1] %vm659, %v859
        %936 = vst.msk [vmem:[%s181 + $0xa1] sm:$0x1] %vm659, %v861
        %937 = vst.msk [vmem:[%s181 + $0xa9] sm:$0x1] %vm659, %v863
        %938 = vst.msk [vmem:[%s181 + $0xb1] sm:$0x1] %vm659, %v865
        %939 = vst.msk [vmem:[%s181 + $0xb9] sm:$0x1] %vm659, %v867
        %940 = vst.msk [vmem:[%s181 + $0xc1] sm:$0x1] %vm659, %v869
        %941 = vst.msk [vmem:[%s181 + $0xc9] sm:$0x1] %vm659, %v871
        %942 = vst.msk [vmem:[%s181 + $0xd1] sm:$0x1] %vm659, %v873
        %943 = vst.msk [vmem:[%s181 + $0xd9] sm:$0x1] %vm659, %v875
        %944 = vst.msk [vmem:[%s181 + $0xe1] sm:$0x1] %vm659, %v877
        %945 = vst.msk [vmem:[%s181 + $0xe9] sm:$0x1] %vm659, %v879
        %946 = vst.msk [vmem:[%s181 + $0xf1] sm:$0x1] %vm659, %v881
        %947 = vst.msk [vmem:[%s181 + $0xf9] sm:$0x1] %vm659, %v883
        %948 = vrot.lane.b32.xlu0 %v695, 92
        %v949 = vpop.permute.xlu0 %948
        %950 = vrot.lane.b32.xlu0 %v699, 92
        %v951 = vpop.permute.xlu0 %950
        %952 = vrot.lane.b32.xlu0 %v703, 92
        %v953 = vpop.permute.xlu0 %952
        %954 = vrot.lane.b32.xlu0 %v707, 92
        %v955 = vpop.permute.xlu0 %954
        %956 = vrot.lane.b32.xlu0 %v711, 92
        %v957 = vpop.permute.xlu0 %956
        %958 = vrot.lane.b32.xlu0 %v715, 92
        %v959 = vpop.permute.xlu0 %958
        %960 = vrot.lane.b32.xlu0 %v719, 92
        %v961 = vpop.permute.xlu0 %960
        %962 = vrot.lane.b32.xlu0 %v723, 92
        %v963 = vpop.permute.xlu0 %962
        %964 = vrot.lane.b32.xlu0 %v727, 92
        %v965 = vpop.permute.xlu0 %964
        %966 = vrot.lane.b32.xlu0 %v731, 92
        %v967 = vpop.permute.xlu0 %966
        %968 = vrot.lane.b32.xlu0 %v735, 92
        %v969 = vpop.permute.xlu0 %968
        %970 = vrot.lane.b32.xlu0 %v739, 92
        %v971 = vpop.permute.xlu0 %970
        %972 = vrot.lane.b32.xlu0 %v743, 92
        %v973 = vpop.permute.xlu0 %972
        %974 = vrot.lane.b32.xlu0 %v747, 92
        %v975 = vpop.permute.xlu0 %974
        %976 = vrot.lane.b32.xlu0 %v751, 92
        %v977 = vpop.permute.xlu0 %976
        %978 = vrot.lane.b32.xlu0 %v755, 92
        %v979 = vpop.permute.xlu0 %978
        %980 = vrot.lane.b32.xlu0 %v759, 92
        %v981 = vpop.permute.xlu0 %980
        %982 = vrot.lane.b32.xlu0 %v763, 92
        %v983 = vpop.permute.xlu0 %982
        %984 = vrot.lane.b32.xlu0 %v767, 92
        %v985 = vpop.permute.xlu0 %984
        %986 = vrot.lane.b32.xlu0 %v771, 92
        %v987 = vpop.permute.xlu0 %986
        %988 = vrot.lane.b32.xlu0 %v775, 92
        %v989 = vpop.permute.xlu0 %988
        %990 = vrot.lane.b32.xlu0 %v779, 92
        %v991 = vpop.permute.xlu0 %990
        %992 = vrot.lane.b32.xlu0 %v783, 92
        %v993 = vpop.permute.xlu0 %992
        %994 = vrot.lane.b32.xlu0 %v787, 92
        %v995 = vpop.permute.xlu0 %994
        %996 = vrot.lane.b32.xlu0 %v791, 92
        %v997 = vpop.permute.xlu0 %996
        %998 = vrot.lane.b32.xlu0 %v795, 92
        %v999 = vpop.permute.xlu0 %998
        %1000 = vrot.lane.b32.xlu0 %v799, 92
        %v1001 = vpop.permute.xlu0 %1000
        %1002 = vrot.lane.b32.xlu0 %v803, 92
        %v1003 = vpop.permute.xlu0 %1002
        %1004 = vrot.lane.b32.xlu0 %v807, 92
        %v1005 = vpop.permute.xlu0 %1004
        %1006 = vrot.lane.b32.xlu0 %v811, 92
        %v1007 = vpop.permute.xlu0 %1006
        %1008 = vrot.lane.b32.xlu0 %v815, 92
        %v1009 = vpop.permute.xlu0 %1008
        %1010 = vrot.lane.b32.xlu0 %v819, 92
        %v1011 = vpop.permute.xlu0 %1010
        %1044 = vst.msk [vmem:[%s181 + $0x2] sm:$0x1] %vm659, %v949
        %1045 = vst.msk [vmem:[%s181 + $0xa] sm:$0x1] %vm659, %v951
        %1046 = vst.msk [vmem:[%s181 + $0x12] sm:$0x1] %vm659, %v953
        %1047 = vst.msk [vmem:[%s181 + $0x1a] sm:$0x1] %vm659, %v955
        %1048 = vst.msk [vmem:[%s181 + $0x22] sm:$0x1] %vm659, %v957
        %1049 = vst.msk [vmem:[%s181 + $0x2a] sm:$0x1] %vm659, %v959
        %1050 = vst.msk [vmem:[%s181 + $0x32] sm:$0x1] %vm659, %v961
        %1051 = vst.msk [vmem:[%s181 + $0x3a] sm:$0x1] %vm659, %v963
        %1052 = vst.msk [vmem:[%s181 + $0x42] sm:$0x1] %vm659, %v965
        %1053 = vst.msk [vmem:[%s181 + $0x4a] sm:$0x1] %vm659, %v967
        %1054 = vst.msk [vmem:[%s181 + $0x52] sm:$0x1] %vm659, %v969
        %1055 = vst.msk [vmem:[%s181 + $0x5a] sm:$0x1] %vm659, %v971
        %1056 = vst.msk [vmem:[%s181 + $0x62] sm:$0x1] %vm659, %v973
        %1057 = vst.msk [vmem:[%s181 + $0x6a] sm:$0x1] %vm659, %v975
        %1058 = vst.msk [vmem:[%s181 + $0x72] sm:$0x1] %vm659, %v977
        %1059 = vst.msk [vmem:[%s181 + $0x7a] sm:$0x1] %vm659, %v979
        %1060 = vst.msk [vmem:[%s181 + $0x82] sm:$0x1] %vm659, %v981
        %1061 = vst.msk [vmem:[%s181 + $0x8a] sm:$0x1] %vm659, %v983
        %1062 = vst.msk [vmem:[%s181 + $0x92] sm:$0x1] %vm659, %v985
        %1063 = vst.msk [vmem:[%s181 + $0x9a] sm:$0x1] %vm659, %v987
        %1064 = vst.msk [vmem:[%s181 + $0xa2] sm:$0x1] %vm659, %v989
        %1065 = vst.msk [vmem:[%s181 + $0xaa] sm:$0x1] %vm659, %v991
        %1066 = vst.msk [vmem:[%s181 + $0xb2] sm:$0x1] %vm659, %v993
        %1067 = vst.msk [vmem:[%s181 + $0xba] sm:$0x1] %vm659, %v995
        %1068 = vst.msk [vmem:[%s181 + $0xc2] sm:$0x1] %vm659, %v997
        %1069 = vst.msk [vmem:[%s181 + $0xca] sm:$0x1] %vm659, %v999
        %1070 = vst.msk [vmem:[%s181 + $0xd2] sm:$0x1] %vm659, %v1001
        %1071 = vst.msk [vmem:[%s181 + $0xda] sm:$0x1] %vm659, %v1003
        %1072 = vst.msk [vmem:[%s181 + $0xe2] sm:$0x1] %vm659, %v1005
        %1073 = vst.msk [vmem:[%s181 + $0xea] sm:$0x1] %vm659, %v1007
        %1074 = vst.msk [vmem:[%s181 + $0xf2] sm:$0x1] %vm659, %v1009
        %1075 = vst.msk [vmem:[%s181 + $0xfa] sm:$0x1] %vm659, %v1011
        %1076 = vrot.lane.b32.xlu0 %v695, 74
        %v1077 = vpop.permute.xlu0 %1076
        %1078 = vrot.lane.b32.xlu0 %v699, 74
        %v1079 = vpop.permute.xlu0 %1078
        %1080 = vrot.lane.b32.xlu0 %v703, 74
        %v1081 = vpop.permute.xlu0 %1080
        %1082 = vrot.lane.b32.xlu0 %v707, 74
        %v1083 = vpop.permute.xlu0 %1082
        %1084 = vrot.lane.b32.xlu0 %v711, 74
        %v1085 = vpop.permute.xlu0 %1084
        %1086 = vrot.lane.b32.xlu0 %v715, 74
        %v1087 = vpop.permute.xlu0 %1086
        %1088 = vrot.lane.b32.xlu0 %v719, 74
        %v1089 = vpop.permute.xlu0 %1088
        %1090 = vrot.lane.b32.xlu0 %v723, 74
        %v1091 = vpop.permute.xlu0 %1090
        %1092 = vrot.lane.b32.xlu0 %v727, 74
        %v1093 = vpop.permute.xlu0 %1092
        %1094 = vrot.lane.b32.xlu0 %v731, 74
        %v1095 = vpop.permute.xlu0 %1094
        %1096 = vrot.lane.b32.xlu0 %v735, 74
        %v1097 = vpop.permute.xlu0 %1096
        %1098 = vrot.lane.b32.xlu0 %v739, 74
        %v1099 = vpop.permute.xlu0 %1098
        %1100 = vrot.lane.b32.xlu0 %v743, 74
        %v1101 = vpop.permute.xlu0 %1100
        %1102 = vrot.lane.b32.xlu0 %v747, 74
        %v1103 = vpop.permute.xlu0 %1102
        %1104 = vrot.lane.b32.xlu0 %v751, 74
        %v1105 = vpop.permute.xlu0 %1104
        %1106 = vrot.lane.b32.xlu0 %v755, 74
        %v1107 = vpop.permute.xlu0 %1106
        %1108 = vrot.lane.b32.xlu0 %v759, 74
        %v1109 = vpop.permute.xlu0 %1108
        %1110 = vrot.lane.b32.xlu0 %v763, 74
        %v1111 = vpop.permute.xlu0 %1110
        %1112 = vrot.lane.b32.xlu0 %v767, 74
        %v1113 = vpop.permute.xlu0 %1112
        %1114 = vrot.lane.b32.xlu0 %v771, 74
        %v1115 = vpop.permute.xlu0 %1114
        %1116 = vrot.lane.b32.xlu0 %v775, 74
        %v1117 = vpop.permute.xlu0 %1116
        %1118 = vrot.lane.b32.xlu0 %v779, 74
        %v1119 = vpop.permute.xlu0 %1118
        %1120 = vrot.lane.b32.xlu0 %v783, 74
        %v1121 = vpop.permute.xlu0 %1120
        %1122 = vrot.lane.b32.xlu0 %v787, 74
        %v1123 = vpop.permute.xlu0 %1122
        %1124 = vrot.lane.b32.xlu0 %v791, 74
        %v1125 = vpop.permute.xlu0 %1124
        %1126 = vrot.lane.b32.xlu0 %v795, 74
        %v1127 = vpop.permute.xlu0 %1126
        %1128 = vrot.lane.b32.xlu0 %v799, 74
        %v1129 = vpop.permute.xlu0 %1128
        %1130 = vrot.lane.b32.xlu0 %v803, 74
        %v1131 = vpop.permute.xlu0 %1130
        %1132 = vrot.lane.b32.xlu0 %v807, 74
        %v1133 = vpop.permute.xlu0 %1132
        %1134 = vrot.lane.b32.xlu0 %v811, 74
        %v1135 = vpop.permute.xlu0 %1134
        %1136 = vrot.lane.b32.xlu0 %v815, 74
        %v1137 = vpop.permute.xlu0 %1136
        %1138 = vrot.lane.b32.xlu0 %v819, 74
        %v1139 = vpop.permute.xlu0 %1138
        %1172 = vst.msk [vmem:[%s181 + $0x3] sm:$0x1] %vm659, %v1077
        %1173 = vst.msk [vmem:[%s181 + $0xb] sm:$0x1] %vm659, %v1079
        %1174 = vst.msk [vmem:[%s181 + $0x13] sm:$0x1] %vm659, %v1081
        %1175 = vst.msk [vmem:[%s181 + $0x1b] sm:$0x1] %vm659, %v1083
        %1176 = vst.msk [vmem:[%s181 + $0x23] sm:$0x1] %vm659, %v1085
        %1177 = vst.msk [vmem:[%s181 + $0x2b] sm:$0x1] %vm659, %v1087
        %1178 = vst.msk [vmem:[%s181 + $0x33] sm:$0x1] %vm659, %v1089
        %1179 = vst.msk [vmem:[%s181 + $0x3b] sm:$0x1] %vm659, %v1091
        %1180 = vst.msk [vmem:[%s181 + $0x43] sm:$0x1] %vm659, %v1093
        %1181 = vst.msk [vmem:[%s181 + $0x4b] sm:$0x1] %vm659, %v1095
        %1182 = vst.msk [vmem:[%s181 + $0x53] sm:$0x1] %vm659, %v1097
        %1183 = vst.msk [vmem:[%s181 + $0x5b] sm:$0x1] %vm659, %v1099
        %1184 = vst.msk [vmem:[%s181 + $0x63] sm:$0x1] %vm659, %v1101
        %1185 = vst.msk [vmem:[%s181 + $0x6b] sm:$0x1] %vm659, %v1103
        %1186 = vst.msk [vmem:[%s181 + $0x73] sm:$0x1] %vm659, %v1105
        %1187 = vst.msk [vmem:[%s181 + $0x7b] sm:$0x1] %vm659, %v1107
        %1188 = vst.msk [vmem:[%s181 + $0x83] sm:$0x1] %vm659, %v1109
        %1189 = vst.msk [vmem:[%s181 + $0x8b] sm:$0x1] %vm659, %v1111
        %1190 = vst.msk [vmem:[%s181 + $0x93] sm:$0x1] %vm659, %v1113
        %1191 = vst.msk [vmem:[%s181 + $0x9b] sm:$0x1] %vm659, %v1115
        %1192 = vst.msk [vmem:[%s181 + $0xa3] sm:$0x1] %vm659, %v1117
        %1193 = vst.msk [vmem:[%s181 + $0xab] sm:$0x1] %vm659, %v1119
        %1194 = vst.msk [vmem:[%s181 + $0xb3] sm:$0x1] %vm659, %v1121
        %1195 = vst.msk [vmem:[%s181 + $0xbb] sm:$0x1] %vm659, %v1123
        %1196 = vst.msk [vmem:[%s181 + $0xc3] sm:$0x1] %vm659, %v1125
        %1197 = vst.msk [vmem:[%s181 + $0xcb] sm:$0x1] %vm659, %v1127
        %1198 = vst.msk [vmem:[%s181 + $0xd3] sm:$0x1] %vm659, %v1129
        %1199 = vst.msk [vmem:[%s181 + $0xdb] sm:$0x1] %vm659, %v1131
        %1200 = vst.msk [vmem:[%s181 + $0xe3] sm:$0x1] %vm659, %v1133
        %1201 = vst.msk [vmem:[%s181 + $0xeb] sm:$0x1] %vm659, %v1135
        %1202 = vst.msk [vmem:[%s181 + $0xf3] sm:$0x1] %vm659, %v1137
        %1203 = vst.msk [vmem:[%s181 + $0xfb] sm:$0x1] %vm659, %v1139
        %1204 = vrot.lane.b32.xlu0 %v695, 56
        %v1205 = vpop.permute.xlu0 %1204
        %1206 = vrot.lane.b32.xlu0 %v699, 56
        %v1207 = vpop.permute.xlu0 %1206
        %1208 = vrot.lane.b32.xlu0 %v703, 56
        %v1209 = vpop.permute.xlu0 %1208
        %1210 = vrot.lane.b32.xlu0 %v707, 56
        %v1211 = vpop.permute.xlu0 %1210
        %1212 = vrot.lane.b32.xlu0 %v711, 56
        %v1213 = vpop.permute.xlu0 %1212
        %1214 = vrot.lane.b32.xlu0 %v715, 56
        %v1215 = vpop.permute.xlu0 %1214
        %1216 = vrot.lane.b32.xlu0 %v719, 56
        %v1217 = vpop.permute.xlu0 %1216
        %1218 = vrot.lane.b32.xlu0 %v723, 56
        %v1219 = vpop.permute.xlu0 %1218
        %1220 = vrot.lane.b32.xlu0 %v727, 56
        %v1221 = vpop.permute.xlu0 %1220
        %1222 = vrot.lane.b32.xlu0 %v731, 56
        %v1223 = vpop.permute.xlu0 %1222
        %1224 = vrot.lane.b32.xlu0 %v735, 56
        %v1225 = vpop.permute.xlu0 %1224
        %1226 = vrot.lane.b32.xlu0 %v739, 56
        %v1227 = vpop.permute.xlu0 %1226
        %1228 = vrot.lane.b32.xlu0 %v743, 56
        %v1229 = vpop.permute.xlu0 %1228
        %1230 = vrot.lane.b32.xlu0 %v747, 56
        %v1231 = vpop.permute.xlu0 %1230
        %1232 = vrot.lane.b32.xlu0 %v751, 56
        %v1233 = vpop.permute.xlu0 %1232
        %1234 = vrot.lane.b32.xlu0 %v755, 56
        %v1235 = vpop.permute.xlu0 %1234
        %1236 = vrot.lane.b32.xlu0 %v759, 56
        %v1237 = vpop.permute.xlu0 %1236
        %1238 = vrot.lane.b32.xlu0 %v763, 56
        %v1239 = vpop.permute.xlu0 %1238
        %1240 = vrot.lane.b32.xlu0 %v767, 56
        %v1241 = vpop.permute.xlu0 %1240
        %1242 = vrot.lane.b32.xlu0 %v771, 56
        %v1243 = vpop.permute.xlu0 %1242
        %1244 = vrot.lane.b32.xlu0 %v775, 56
        %v1245 = vpop.permute.xlu0 %1244
        %1246 = vrot.lane.b32.xlu0 %v779, 56
        %v1247 = vpop.permute.xlu0 %1246
        %1248 = vrot.lane.b32.xlu0 %v783, 56
        %v1249 = vpop.permute.xlu0 %1248
        %1250 = vrot.lane.b32.xlu0 %v787, 56
        %v1251 = vpop.permute.xlu0 %1250
        %1252 = vrot.lane.b32.xlu0 %v791, 56
        %v1253 = vpop.permute.xlu0 %1252
        %1254 = vrot.lane.b32.xlu0 %v795, 56
        %v1255 = vpop.permute.xlu0 %1254
        %1256 = vrot.lane.b32.xlu0 %v799, 56
        %v1257 = vpop.permute.xlu0 %1256
        %1258 = vrot.lane.b32.xlu0 %v803, 56
        %v1259 = vpop.permute.xlu0 %1258
        %1260 = vrot.lane.b32.xlu0 %v807, 56
        %v1261 = vpop.permute.xlu0 %1260
        %1262 = vrot.lane.b32.xlu0 %v811, 56
        %v1263 = vpop.permute.xlu0 %1262
        %1264 = vrot.lane.b32.xlu0 %v815, 56
        %v1265 = vpop.permute.xlu0 %1264
        %1266 = vrot.lane.b32.xlu0 %v819, 56
        %v1267 = vpop.permute.xlu0 %1266
        %1300 = vst.msk [vmem:[%s181 + $0x4] sm:$0x1] %vm659, %v1205
        %1301 = vst.msk [vmem:[%s181 + $0xc] sm:$0x1] %vm659, %v1207
        %1302 = vst.msk [vmem:[%s181 + $0x14] sm:$0x1] %vm659, %v1209
        %1303 = vst.msk [vmem:[%s181 + $0x1c] sm:$0x1] %vm659, %v1211
        %1304 = vst.msk [vmem:[%s181 + $0x24] sm:$0x1] %vm659, %v1213
        %1305 = vst.msk [vmem:[%s181 + $0x2c] sm:$0x1] %vm659, %v1215
        %1306 = vst.msk [vmem:[%s181 + $0x34] sm:$0x1] %vm659, %v1217
        %1307 = vst.msk [vmem:[%s181 + $0x3c] sm:$0x1] %vm659, %v1219
        %1308 = vst.msk [vmem:[%s181 + $0x44] sm:$0x1] %vm659, %v1221
        %1309 = vst.msk [vmem:[%s181 + $0x4c] sm:$0x1] %vm659, %v1223
        %1310 = vst.msk [vmem:[%s181 + $0x54] sm:$0x1] %vm659, %v1225
        %1311 = vst.msk [vmem:[%s181 + $0x5c] sm:$0x1] %vm659, %v1227
        %1312 = vst.msk [vmem:[%s181 + $0x64] sm:$0x1] %vm659, %v1229
        %1313 = vst.msk [vmem:[%s181 + $0x6c] sm:$0x1] %vm659, %v1231
        %1314 = vst.msk [vmem:[%s181 + $0x74] sm:$0x1] %vm659, %v1233
        %1315 = vst.msk [vmem:[%s181 + $0x7c] sm:$0x1] %vm659, %v1235
        %1316 = vst.msk [vmem:[%s181 + $0x84] sm:$0x1] %vm659, %v1237
        %1317 = vst.msk [vmem:[%s181 + $0x8c] sm:$0x1] %vm659, %v1239
        %1318 = vst.msk [vmem:[%s181 + $0x94] sm:$0x1] %vm659, %v1241
        %1319 = vst.msk [vmem:[%s181 + $0x9c] sm:$0x1] %vm659, %v1243
        %1320 = vst.msk [vmem:[%s181 + $0xa4] sm:$0x1] %vm659, %v1245
        %1321 = vst.msk [vmem:[%s181 + $0xac] sm:$0x1] %vm659, %v1247
        %1322 = vst.msk [vmem:[%s181 + $0xb4] sm:$0x1] %vm659, %v1249
        %1323 = vst.msk [vmem:[%s181 + $0xbc] sm:$0x1] %vm659, %v1251
        %1324 = vst.msk [vmem:[%s181 + $0xc4] sm:$0x1] %vm659, %v1253
        %1325 = vst.msk [vmem:[%s181 + $0xcc] sm:$0x1] %vm659, %v1255
        %1326 = vst.msk [vmem:[%s181 + $0xd4] sm:$0x1] %vm659, %v1257
        %1327 = vst.msk [vmem:[%s181 + $0xdc] sm:$0x1] %vm659, %v1259
        %1328 = vst.msk [vmem:[%s181 + $0xe4] sm:$0x1] %vm659, %v1261
        %1329 = vst.msk [vmem:[%s181 + $0xec] sm:$0x1] %vm659, %v1263
        %1330 = vst.msk [vmem:[%s181 + $0xf4] sm:$0x1] %vm659, %v1265
        %1331 = vst.msk [vmem:[%s181 + $0xfc] sm:$0x1] %vm659, %v1267
        %1332 = vrot.lane.b32.xlu0 %v695, 38
        %v1333 = vpop.permute.xlu0 %1332
        %1334 = vrot.lane.b32.xlu0 %v699, 38
        %v1335 = vpop.permute.xlu0 %1334
        %1336 = vrot.lane.b32.xlu0 %v703, 38
        %v1337 = vpop.permute.xlu0 %1336
        %1338 = vrot.lane.b32.xlu0 %v707, 38
        %v1339 = vpop.permute.xlu0 %1338
        %1340 = vrot.lane.b32.xlu0 %v711, 38
        %v1341 = vpop.permute.xlu0 %1340
        %1342 = vrot.lane.b32.xlu0 %v715, 38
        %v1343 = vpop.permute.xlu0 %1342
        %1344 = vrot.lane.b32.xlu0 %v719, 38
        %v1345 = vpop.permute.xlu0 %1344
        %1346 = vrot.lane.b32.xlu0 %v723, 38
        %v1347 = vpop.permute.xlu0 %1346
        %1348 = vrot.lane.b32.xlu0 %v727, 38
        %v1349 = vpop.permute.xlu0 %1348
        %1350 = vrot.lane.b32.xlu0 %v731, 38
        %v1351 = vpop.permute.xlu0 %1350
        %1352 = vrot.lane.b32.xlu0 %v735, 38
        %v1353 = vpop.permute.xlu0 %1352
        %1354 = vrot.lane.b32.xlu0 %v739, 38
        %v1355 = vpop.permute.xlu0 %1354
        %1356 = vrot.lane.b32.xlu0 %v743, 38
        %v1357 = vpop.permute.xlu0 %1356
        %1358 = vrot.lane.b32.xlu0 %v747, 38
        %v1359 = vpop.permute.xlu0 %1358
        %1360 = vrot.lane.b32.xlu0 %v751, 38
        %v1361 = vpop.permute.xlu0 %1360
        %1362 = vrot.lane.b32.xlu0 %v755, 38
        %v1363 = vpop.permute.xlu0 %1362
        %1364 = vrot.lane.b32.xlu0 %v759, 38
        %v1365 = vpop.permute.xlu0 %1364
        %1366 = vrot.lane.b32.xlu0 %v763, 38
        %v1367 = vpop.permute.xlu0 %1366
        %1368 = vrot.lane.b32.xlu0 %v767, 38
        %v1369 = vpop.permute.xlu0 %1368
        %1370 = vrot.lane.b32.xlu0 %v771, 38
        %v1371 = vpop.permute.xlu0 %1370
        %1372 = vrot.lane.b32.xlu0 %v775, 38
        %v1373 = vpop.permute.xlu0 %1372
        %1374 = vrot.lane.b32.xlu0 %v779, 38
        %v1375 = vpop.permute.xlu0 %1374
        %1376 = vrot.lane.b32.xlu0 %v783, 38
        %v1377 = vpop.permute.xlu0 %1376
        %1378 = vrot.lane.b32.xlu0 %v787, 38
        %v1379 = vpop.permute.xlu0 %1378
        %1380 = vrot.lane.b32.xlu0 %v791, 38
        %v1381 = vpop.permute.xlu0 %1380
        %1382 = vrot.lane.b32.xlu0 %v795, 38
        %v1383 = vpop.permute.xlu0 %1382
        %1384 = vrot.lane.b32.xlu0 %v799, 38
        %v1385 = vpop.permute.xlu0 %1384
        %1386 = vrot.lane.b32.xlu0 %v803, 38
        %v1387 = vpop.permute.xlu0 %1386
        %1388 = vrot.lane.b32.xlu0 %v807, 38
        %v1389 = vpop.permute.xlu0 %1388
        %1390 = vrot.lane.b32.xlu0 %v811, 38
        %v1391 = vpop.permute.xlu0 %1390
        %1392 = vrot.lane.b32.xlu0 %v815, 38
        %v1393 = vpop.permute.xlu0 %1392
        %1394 = vrot.lane.b32.xlu0 %v819, 38
        %v1395 = vpop.permute.xlu0 %1394
        %1428 = vst.msk [vmem:[%s181 + $0x5] sm:$0x1] %vm659, %v1333
        %1429 = vst.msk [vmem:[%s181 + $0xd] sm:$0x1] %vm659, %v1335
        %1430 = vst.msk [vmem:[%s181 + $0x15] sm:$0x1] %vm659, %v1337
        %1431 = vst.msk [vmem:[%s181 + $0x1d] sm:$0x1] %vm659, %v1339
        %1432 = vst.msk [vmem:[%s181 + $0x25] sm:$0x1] %vm659, %v1341
        %1433 = vst.msk [vmem:[%s181 + $0x2d] sm:$0x1] %vm659, %v1343
        %1434 = vst.msk [vmem:[%s181 + $0x35] sm:$0x1] %vm659, %v1345
        %1435 = vst.msk [vmem:[%s181 + $0x3d] sm:$0x1] %vm659, %v1347
        %1436 = vst.msk [vmem:[%s181 + $0x45] sm:$0x1] %vm659, %v1349
        %1437 = vst.msk [vmem:[%s181 + $0x4d] sm:$0x1] %vm659, %v1351
        %1438 = vst.msk [vmem:[%s181 + $0x55] sm:$0x1] %vm659, %v1353
        %1439 = vst.msk [vmem:[%s181 + $0x5d] sm:$0x1] %vm659, %v1355
        %1440 = vst.msk [vmem:[%s181 + $0x65] sm:$0x1] %vm659, %v1357
        %1441 = vst.msk [vmem:[%s181 + $0x6d] sm:$0x1] %vm659, %v1359
        %1442 = vst.msk [vmem:[%s181 + $0x75] sm:$0x1] %vm659, %v1361
        %1443 = vst.msk [vmem:[%s181 + $0x7d] sm:$0x1] %vm659, %v1363
        %1444 = vst.msk [vmem:[%s181 + $0x85] sm:$0x1] %vm659, %v1365
        %1445 = vst.msk [vmem:[%s181 + $0x8d] sm:$0x1] %vm659, %v1367
        %1446 = vst.msk [vmem:[%s181 + $0x95] sm:$0x1] %vm659, %v1369
        %1447 = vst.msk [vmem:[%s181 + $0x9d] sm:$0x1] %vm659, %v1371
        %1448 = vst.msk [vmem:[%s181 + $0xa5] sm:$0x1] %vm659, %v1373
        %1449 = vst.msk [vmem:[%s181 + $0xad] sm:$0x1] %vm659, %v1375
        %1450 = vst.msk [vmem:[%s181 + $0xb5] sm:$0x1] %vm659, %v1377
        %1451 = vst.msk [vmem:[%s181 + $0xbd] sm:$0x1] %vm659, %v1379
        %1452 = vst.msk [vmem:[%s181 + $0xc5] sm:$0x1] %vm659, %v1381
        %1453 = vst.msk [vmem:[%s181 + $0xcd] sm:$0x1] %vm659, %v1383
        %1454 = vst.msk [vmem:[%s181 + $0xd5] sm:$0x1] %vm659, %v1385
        %1455 = vst.msk [vmem:[%s181 + $0xdd] sm:$0x1] %vm659, %v1387
        %1456 = vst.msk [vmem:[%s181 + $0xe5] sm:$0x1] %vm659, %v1389
        %1457 = vst.msk [vmem:[%s181 + $0xed] sm:$0x1] %vm659, %v1391
        %1458 = vst.msk [vmem:[%s181 + $0xf5] sm:$0x1] %vm659, %v1393
        %1459 = vst.msk [vmem:[%s181 + $0xfd] sm:$0x1] %vm659, %v1395
        %1460 = vrot.lane.b32.xlu0 %v695, 20
        %v1461 = vpop.permute.xlu0 %1460
        %1462 = vrot.lane.b32.xlu0 %v699, 20
        %v1463 = vpop.permute.xlu0 %1462
        %1464 = vrot.lane.b32.xlu0 %v703, 20
        %v1465 = vpop.permute.xlu0 %1464
        %1466 = vrot.lane.b32.xlu0 %v707, 20
        %v1467 = vpop.permute.xlu0 %1466
        %1468 = vrot.lane.b32.xlu0 %v711, 20
        %v1469 = vpop.permute.xlu0 %1468
        %1470 = vrot.lane.b32.xlu0 %v715, 20
        %v1471 = vpop.permute.xlu0 %1470
        %1472 = vrot.lane.b32.xlu0 %v719, 20
        %v1473 = vpop.permute.xlu0 %1472
        %1474 = vrot.lane.b32.xlu0 %v723, 20
        %v1475 = vpop.permute.xlu0 %1474
        %1476 = vrot.lane.b32.xlu0 %v727, 20
        %v1477 = vpop.permute.xlu0 %1476
        %1478 = vrot.lane.b32.xlu0 %v731, 20
        %v1479 = vpop.permute.xlu0 %1478
        %1480 = vrot.lane.b32.xlu0 %v735, 20
        %v1481 = vpop.permute.xlu0 %1480
        %1482 = vrot.lane.b32.xlu0 %v739, 20
        %v1483 = vpop.permute.xlu0 %1482
        %1484 = vrot.lane.b32.xlu0 %v743, 20
        %v1485 = vpop.permute.xlu0 %1484
        %1486 = vrot.lane.b32.xlu0 %v747, 20
        %v1487 = vpop.permute.xlu0 %1486
        %1488 = vrot.lane.b32.xlu0 %v751, 20
        %v1489 = vpop.permute.xlu0 %1488
        %1490 = vrot.lane.b32.xlu0 %v755, 20
        %v1491 = vpop.permute.xlu0 %1490
        %1492 = vrot.lane.b32.xlu0 %v759, 20
        %v1493 = vpop.permute.xlu0 %1492
        %1494 = vrot.lane.b32.xlu0 %v763, 20
        %v1495 = vpop.permute.xlu0 %1494
        %1496 = vrot.lane.b32.xlu0 %v767, 20
        %v1497 = vpop.permute.xlu0 %1496
        %1498 = vrot.lane.b32.xlu0 %v771, 20
        %v1499 = vpop.permute.xlu0 %1498
        %1500 = vrot.lane.b32.xlu0 %v775, 20
        %v1501 = vpop.permute.xlu0 %1500
        %1502 = vrot.lane.b32.xlu0 %v779, 20
        %v1503 = vpop.permute.xlu0 %1502
        %1504 = vrot.lane.b32.xlu0 %v783, 20
        %v1505 = vpop.permute.xlu0 %1504
        %1506 = vrot.lane.b32.xlu0 %v787, 20
        %v1507 = vpop.permute.xlu0 %1506
        %1508 = vrot.lane.b32.xlu0 %v791, 20
        %v1509 = vpop.permute.xlu0 %1508
        %1510 = vrot.lane.b32.xlu0 %v795, 20
        %v1511 = vpop.permute.xlu0 %1510
        %1512 = vrot.lane.b32.xlu0 %v799, 20
        %v1513 = vpop.permute.xlu0 %1512
        %1514 = vrot.lane.b32.xlu0 %v803, 20
        %v1515 = vpop.permute.xlu0 %1514
        %1516 = vrot.lane.b32.xlu0 %v807, 20
        %v1517 = vpop.permute.xlu0 %1516
        %1518 = vrot.lane.b32.xlu0 %v811, 20
        %v1519 = vpop.permute.xlu0 %1518
        %1520 = vrot.lane.b32.xlu0 %v815, 20
        %v1521 = vpop.permute.xlu0 %1520
        %1522 = vrot.lane.b32.xlu0 %v819, 20
        %v1523 = vpop.permute.xlu0 %1522
        %1556 = vst.msk [vmem:[%s181 + $0x6] sm:$0x1] %vm659, %v1461
        %1557 = vst.msk [vmem:[%s181 + $0xe] sm:$0x1] %vm659, %v1463
        %1558 = vst.msk [vmem:[%s181 + $0x16] sm:$0x1] %vm659, %v1465
        %1559 = vst.msk [vmem:[%s181 + $0x1e] sm:$0x1] %vm659, %v1467
        %1560 = vst.msk [vmem:[%s181 + $0x26] sm:$0x1] %vm659, %v1469
        %1561 = vst.msk [vmem:[%s181 + $0x2e] sm:$0x1] %vm659, %v1471
        %1562 = vst.msk [vmem:[%s181 + $0x36] sm:$0x1] %vm659, %v1473
        %1563 = vst.msk [vmem:[%s181 + $0x3e] sm:$0x1] %vm659, %v1475
        %1564 = vst.msk [vmem:[%s181 + $0x46] sm:$0x1] %vm659, %v1477
        %1565 = vst.msk [vmem:[%s181 + $0x4e] sm:$0x1] %vm659, %v1479
        %1566 = vst.msk [vmem:[%s181 + $0x56] sm:$0x1] %vm659, %v1481
        %1567 = vst.msk [vmem:[%s181 + $0x5e] sm:$0x1] %vm659, %v1483
        %1568 = vst.msk [vmem:[%s181 + $0x66] sm:$0x1] %vm659, %v1485
        %1569 = vst.msk [vmem:[%s181 + $0x6e] sm:$0x1] %vm659, %v1487
        %1570 = vst.msk [vmem:[%s181 + $0x76] sm:$0x1] %vm659, %v1489
        %1571 = vst.msk [vmem:[%s181 + $0x7e] sm:$0x1] %vm659, %v1491
        %1572 = vst.msk [vmem:[%s181 + $0x86] sm:$0x1] %vm659, %v1493
        %1573 = vst.msk [vmem:[%s181 + $0x8e] sm:$0x1] %vm659, %v1495
        %1574 = vst.msk [vmem:[%s181 + $0x96] sm:$0x1] %vm659, %v1497
        %1575 = vst.msk [vmem:[%s181 + $0x9e] sm:$0x1] %vm659, %v1499
        %1576 = vst.msk [vmem:[%s181 + $0xa6] sm:$0x1] %vm659, %v1501
        %1577 = vst.msk [vmem:[%s181 + $0xae] sm:$0x1] %vm659, %v1503
        %1578 = vst.msk [vmem:[%s181 + $0xb6] sm:$0x1] %vm659, %v1505
        %1579 = vst.msk [vmem:[%s181 + $0xbe] sm:$0x1] %vm659, %v1507
        %1580 = vst.msk [vmem:[%s181 + $0xc6] sm:$0x1] %vm659, %v1509
        %1581 = vst.msk [vmem:[%s181 + $0xce] sm:$0x1] %vm659, %v1511
        %1582 = vst.msk [vmem:[%s181 + $0xd6] sm:$0x1] %vm659, %v1513
        %1583 = vst.msk [vmem:[%s181 + $0xde] sm:$0x1] %vm659, %v1515
        %1584 = vst.msk [vmem:[%s181 + $0xe6] sm:$0x1] %vm659, %v1517
        %1585 = vst.msk [vmem:[%s181 + $0xee] sm:$0x1] %vm659, %v1519
        %1586 = vst.msk [vmem:[%s181 + $0xf6] sm:$0x1] %vm659, %v1521
        %1587 = vst.msk [vmem:[%s181 + $0xfe] sm:$0x1] %vm659, %v1523
        %v1592 = vcombine.low %v419, %v420
        %v1593 = vcombine.high %v419, %v420
        %v1595 = vunpack.c.l.s4 1966171168
        %v1596 = vunpack.c.0.s8 %v1595
        %v1597 = vlaneseq
        %v1598 = vshrl.u32 %v1597, 7
        %v1599 = vsub.s32 %v1596, %v1598
        %v1600 = vrot.slane %v1592, %v1599
        %v1602 = vunpack.c.l.s4 1966171168
        %v1603 = vunpack.c.0.s8 %v1602
        %v1604 = vlaneseq
        %v1605 = vshrl.u32 %v1604, 7
        %v1606 = vsub.s32 %v1603, %v1605
        %v1607 = vrot.slane %v1593, %v1606
        %v1608 = vcombine.high %v1600, %v1600
        %v1609 = vcombine.high %v1607, %v1607
        %v1611 = vunpack.c.l.s4 1966171168
        %v1612 = vunpack.c.0.s8 %v1611
        %v1613 = vlaneseq
        %v1614 = vshrl.u32 %v1613, 7
        %v1615 = vsub.s32 %v1612, %v1614
        %v1616 = vrot.slane %v1600, %v1615
        %v1618 = vunpack.c.l.s4 1966171168
        %v1619 = vunpack.c.0.s8 %v1618
        %v1620 = vlaneseq
        %v1621 = vshrl.u32 %v1620, 7
        %v1622 = vsub.s32 %v1619, %v1621
        %v1623 = vrot.slane %v1607, %v1622
        %v1625 = vunpack.c.l.s4 1966171168
        %v1626 = vunpack.c.0.s8 %v1625
        %v1627 = vlaneseq
        %v1628 = vshrl.u32 %v1627, 7
        %v1629 = vsub.s32 %v1626, %v1628
        %v1630 = vrot.slane %v1608, %v1629
        %v1632 = vunpack.c.l.s4 1966171168
        %v1633 = vunpack.c.0.s8 %v1632
        %v1634 = vlaneseq
        %v1635 = vshrl.u32 %v1634, 7
        %v1636 = vsub.s32 %v1633, %v1635
        %v1637 = vrot.slane %v1609, %v1636
        %v1638 = vcombine.high %v1616, %v1616
        %v1639 = vcombine.high %v1623, %v1623
        %v1640 = vcombine.high %v1630, %v1630
        %v1641 = vcombine.high %v1637, %v1637
        %v1642 = vcombine.low %v421, %v422
        %v1643 = vcombine.high %v421, %v422
        %v1645 = vunpack.c.l.s4 1966171168
        %v1646 = vunpack.c.0.s8 %v1645
        %v1647 = vlaneseq
        %v1648 = vshrl.u32 %v1647, 7
        %v1649 = vsub.s32 %v1646, %v1648
        %v1650 = vrot.slane %v1642, %v1649
        %v1652 = vunpack.c.l.s4 1966171168
        %v1653 = vunpack.c.0.s8 %v1652
        %v1654 = vlaneseq
        %v1655 = vshrl.u32 %v1654, 7
        %v1656 = vsub.s32 %v1653, %v1655
        %v1657 = vrot.slane %v1643, %v1656
        %v1658 = vcombine.high %v1650, %v1650
        %v1659 = vcombine.high %v1657, %v1657
        %v1661 = vunpack.c.l.s4 1966171168
        %v1662 = vunpack.c.0.s8 %v1661
        %v1663 = vlaneseq
        %v1664 = vshrl.u32 %v1663, 7
        %v1665 = vsub.s32 %v1662, %v1664
        %v1666 = vrot.slane %v1650, %v1665
        %v1668 = vunpack.c.l.s4 1966171168
        %v1669 = vunpack.c.0.s8 %v1668
        %v1670 = vlaneseq
        %v1671 = vshrl.u32 %v1670, 7
        %v1672 = vsub.s32 %v1669, %v1671
        %v1673 = vrot.slane %v1657, %v1672
        %v1675 = vunpack.c.l.s4 1966171168
        %v1676 = vunpack.c.0.s8 %v1675
        %v1677 = vlaneseq
        %v1678 = vshrl.u32 %v1677, 7
        %v1679 = vsub.s32 %v1676, %v1678
        %v1680 = vrot.slane %v1658, %v1679
        %v1682 = vunpack.c.l.s4 1966171168
        %v1683 = vunpack.c.0.s8 %v1682
        %v1684 = vlaneseq
        %v1685 = vshrl.u32 %v1684, 7
        %v1686 = vsub.s32 %v1683, %v1685
        %v1687 = vrot.slane %v1659, %v1686
        %v1688 = vcombine.high %v1666, %v1666
        %v1689 = vcombine.high %v1673, %v1673
        %v1690 = vcombine.high %v1680, %v1680
        %v1691 = vcombine.high %v1687, %v1687
        %v1692 = vcombine.low %v423, %v424
        %v1693 = vcombine.high %v423, %v424
        %v1695 = vunpack.c.l.s4 1966171168
        %v1696 = vunpack.c.0.s8 %v1695
        %v1697 = vlaneseq
        %v1698 = vshrl.u32 %v1697, 7
        %v1699 = vsub.s32 %v1696, %v1698
        %v1700 = vrot.slane %v1692, %v1699
        %v1702 = vunpack.c.l.s4 1966171168
        %v1703 = vunpack.c.0.s8 %v1702
        %v1704 = vlaneseq
        %v1705 = vshrl.u32 %v1704, 7
        %v1706 = vsub.s32 %v1703, %v1705
        %v1707 = vrot.slane %v1693, %v1706
        %v1708 = vcombine.high %v1700, %v1700
        %v1709 = vcombine.high %v1707, %v1707
        %v1711 = vunpack.c.l.s4 1966171168
        %v1712 = vunpack.c.0.s8 %v1711
        %v1713 = vlaneseq
        %v1714 = vshrl.u32 %v1713, 7
        %v1715 = vsub.s32 %v1712, %v1714
        %v1716 = vrot.slane %v1700, %v1715
        %v1718 = vunpack.c.l.s4 1966171168
        %v1719 = vunpack.c.0.s8 %v1718
        %v1720 = vlaneseq
        %v1721 = vshrl.u32 %v1720, 7
        %v1722 = vsub.s32 %v1719, %v1721
        %v1723 = vrot.slane %v1707, %v1722
        %v1725 = vunpack.c.l.s4 1966171168
        %v1726 = vunpack.c.0.s8 %v1725
        %v1727 = vlaneseq
        %v1728 = vshrl.u32 %v1727, 7
        %v1729 = vsub.s32 %v1726, %v1728
        %v1730 = vrot.slane %v1708, %v1729
        %v1732 = vunpack.c.l.s4 1966171168
        %v1733 = vunpack.c.0.s8 %v1732
        %v1734 = vlaneseq
        %v1735 = vshrl.u32 %v1734, 7
        %v1736 = vsub.s32 %v1733, %v1735
        %v1737 = vrot.slane %v1709, %v1736
        %v1738 = vcombine.high %v1716, %v1716
        %v1739 = vcombine.high %v1723, %v1723
        %v1740 = vcombine.high %v1730, %v1730
        %v1741 = vcombine.high %v1737, %v1737
        %v1742 = vcombine.low %v425, %v426
        %v1743 = vcombine.high %v425, %v426
        %v1745 = vunpack.c.l.s4 1966171168
        %v1746 = vunpack.c.0.s8 %v1745
        %v1747 = vlaneseq
        %v1748 = vshrl.u32 %v1747, 7
        %v1749 = vsub.s32 %v1746, %v1748
        %v1750 = vrot.slane %v1742, %v1749
        %v1752 = vunpack.c.l.s4 1966171168
        %v1753 = vunpack.c.0.s8 %v1752
        %v1754 = vlaneseq
        %v1755 = vshrl.u32 %v1754, 7
        %v1756 = vsub.s32 %v1753, %v1755
        %v1757 = vrot.slane %v1743, %v1756
        %v1758 = vcombine.high %v1750, %v1750
        %v1759 = vcombine.high %v1757, %v1757
        %v1761 = vunpack.c.l.s4 1966171168
        %v1762 = vunpack.c.0.s8 %v1761
        %v1763 = vlaneseq
        %v1764 = vshrl.u32 %v1763, 7
        %v1765 = vsub.s32 %v1762, %v1764
        %v1766 = vrot.slane %v1750, %v1765
        %v1768 = vunpack.c.l.s4 1966171168
        %v1769 = vunpack.c.0.s8 %v1768
        %v1770 = vlaneseq
        %v1771 = vshrl.u32 %v1770, 7
        %v1772 = vsub.s32 %v1769, %v1771
        %v1773 = vrot.slane %v1757, %v1772
        %v1775 = vunpack.c.l.s4 1966171168
        %v1776 = vunpack.c.0.s8 %v1775
        %v1777 = vlaneseq
        %v1778 = vshrl.u32 %v1777, 7
        %v1779 = vsub.s32 %v1776, %v1778
        %v1780 = vrot.slane %v1758, %v1779
        %v1782 = vunpack.c.l.s4 1966171168
        %v1783 = vunpack.c.0.s8 %v1782
        %v1784 = vlaneseq
        %v1785 = vshrl.u32 %v1784, 7
        %v1786 = vsub.s32 %v1783, %v1785
        %v1787 = vrot.slane %v1759, %v1786
        %v1788 = vcombine.high %v1766, %v1766
        %v1789 = vcombine.high %v1773, %v1773
        %v1790 = vcombine.high %v1780, %v1780
        %v1791 = vcombine.high %v1787, %v1787
        %v1792 = vlaneseq
        %v1793 = vshrl.u32 %v1792, 7
        %v1794 = vsub.s32 0, %v1793
        %v1795 = vrot.slane %v1616, %v1794
        %v1796 = vlaneseq
        %v1797 = vshrl.u32 %v1796, 7
        %v1798 = vsub.s32 1, %v1797
        %v1799 = vrot.slane %v1616, %v1798
        %v1800 = vlaneseq
        %v1801 = vshrl.u32 %v1800, 7
        %v1802 = vsub.s32 0, %v1801
        %v1803 = vrot.slane %v1630, %v1802
        %v1804 = vlaneseq
        %v1805 = vshrl.u32 %v1804, 7
        %v1806 = vsub.s32 1, %v1805
        %v1807 = vrot.slane %v1630, %v1806
        %v1808 = vlaneseq
        %v1809 = vshrl.u32 %v1808, 7
        %v1810 = vsub.s32 0, %v1809
        %v1811 = vrot.slane %v1638, %v1810
        %v1812 = vlaneseq
        %v1813 = vshrl.u32 %v1812, 7
        %v1814 = vsub.s32 1, %v1813
        %v1815 = vrot.slane %v1638, %v1814
        %v1816 = vlaneseq
        %v1817 = vshrl.u32 %v1816, 7
        %v1818 = vsub.s32 0, %v1817
        %v1819 = vrot.slane %v1640, %v1818
        %v1820 = vlaneseq
        %v1821 = vshrl.u32 %v1820, 7
        %v1822 = vsub.s32 1, %v1821
        %v1823 = vrot.slane %v1640, %v1822
        %v1824 = vlaneseq
        %v1825 = vshrl.u32 %v1824, 7
        %v1826 = vsub.s32 0, %v1825
        %v1827 = vrot.slane %v1623, %v1826
        %v1828 = vlaneseq
        %v1829 = vshrl.u32 %v1828, 7
        %v1830 = vsub.s32 1, %v1829
        %v1831 = vrot.slane %v1623, %v1830
        %v1832 = vlaneseq
        %v1833 = vshrl.u32 %v1832, 7
        %v1834 = vsub.s32 0, %v1833
        %v1835 = vrot.slane %v1637, %v1834
        %v1836 = vlaneseq
        %v1837 = vshrl.u32 %v1836, 7
        %v1838 = vsub.s32 1, %v1837
        %v1839 = vrot.slane %v1637, %v1838
        %v1840 = vlaneseq
        %v1841 = vshrl.u32 %v1840, 7
        %v1842 = vsub.s32 0, %v1841
        %v1843 = vrot.slane %v1639, %v1842
        %v1844 = vlaneseq
        %v1845 = vshrl.u32 %v1844, 7
        %v1846 = vsub.s32 1, %v1845
        %v1847 = vrot.slane %v1639, %v1846
        %v1848 = vlaneseq
        %v1849 = vshrl.u32 %v1848, 7
        %v1850 = vsub.s32 0, %v1849
        %v1851 = vrot.slane %v1641, %v1850
        %v1852 = vlaneseq
        %v1853 = vshrl.u32 %v1852, 7
        %v1854 = vsub.s32 1, %v1853
        %v1855 = vrot.slane %v1641, %v1854
        %v1856 = vlaneseq
        %v1857 = vshrl.u32 %v1856, 7
        %v1858 = vsub.s32 0, %v1857
        %v1859 = vrot.slane %v1666, %v1858
        %v1860 = vlaneseq
        %v1861 = vshrl.u32 %v1860, 7
        %v1862 = vsub.s32 1, %v1861
        %v1863 = vrot.slane %v1666, %v1862
        %v1864 = vlaneseq
        %v1865 = vshrl.u32 %v1864, 7
        %v1866 = vsub.s32 0, %v1865
        %v1867 = vrot.slane %v1680, %v1866
        %v1868 = vlaneseq
        %v1869 = vshrl.u32 %v1868, 7
        %v1870 = vsub.s32 1, %v1869
        %v1871 = vrot.slane %v1680, %v1870
        %v1872 = vlaneseq
        %v1873 = vshrl.u32 %v1872, 7
        %v1874 = vsub.s32 0, %v1873
        %v1875 = vrot.slane %v1688, %v1874
        %v1876 = vlaneseq
        %v1877 = vshrl.u32 %v1876, 7
        %v1878 = vsub.s32 1, %v1877
        %v1879 = vrot.slane %v1688, %v1878
        %v1880 = vlaneseq
        %v1881 = vshrl.u32 %v1880, 7
        %v1882 = vsub.s32 0, %v1881
        %v1883 = vrot.slane %v1690, %v1882
        %v1884 = vlaneseq
        %v1885 = vshrl.u32 %v1884, 7
        %v1886 = vsub.s32 1, %v1885
        %v1887 = vrot.slane %v1690, %v1886
        %v1888 = vlaneseq
        %v1889 = vshrl.u32 %v1888, 7
        %v1890 = vsub.s32 0, %v1889
        %v1891 = vrot.slane %v1673, %v1890
        %v1892 = vlaneseq
        %v1893 = vshrl.u32 %v1892, 7
        %v1894 = vsub.s32 1, %v1893
        %v1895 = vrot.slane %v1673, %v1894
        %v1896 = vlaneseq
        %v1897 = vshrl.u32 %v1896, 7
        %v1898 = vsub.s32 0, %v1897
        %v1899 = vrot.slane %v1687, %v1898
        %v1900 = vlaneseq
        %v1901 = vshrl.u32 %v1900, 7
        %v1902 = vsub.s32 1, %v1901
        %v1903 = vrot.slane %v1687, %v1902
        %v1904 = vlaneseq
        %v1905 = vshrl.u32 %v1904, 7
        %v1906 = vsub.s32 0, %v1905
        %v1907 = vrot.slane %v1689, %v1906
        %v1908 = vlaneseq
        %v1909 = vshrl.u32 %v1908, 7
        %v1910 = vsub.s32 1, %v1909
        %v1911 = vrot.slane %v1689, %v1910
        %v1912 = vlaneseq
        %v1913 = vshrl.u32 %v1912, 7
        %v1914 = vsub.s32 0, %v1913
        %v1915 = vrot.slane %v1691, %v1914
        %v1916 = vlaneseq
        %v1917 = vshrl.u32 %v1916, 7
        %v1918 = vsub.s32 1, %v1917
        %v1919 = vrot.slane %v1691, %v1918
        %v1920 = vlaneseq
        %v1921 = vshrl.u32 %v1920, 7
        %v1922 = vsub.s32 0, %v1921
        %v1923 = vrot.slane %v1716, %v1922
        %v1924 = vlaneseq
        %v1925 = vshrl.u32 %v1924, 7
        %v1926 = vsub.s32 1, %v1925
        %v1927 = vrot.slane %v1716, %v1926
        %v1928 = vlaneseq
        %v1929 = vshrl.u32 %v1928, 7
        %v1930 = vsub.s32 0, %v1929
        %v1931 = vrot.slane %v1730, %v1930
        %v1932 = vlaneseq
        %v1933 = vshrl.u32 %v1932, 7
        %v1934 = vsub.s32 1, %v1933
        %v1935 = vrot.slane %v1730, %v1934
        %v1936 = vlaneseq
        %v1937 = vshrl.u32 %v1936, 7
        %v1938 = vsub.s32 0, %v1937
        %v1939 = vrot.slane %v1738, %v1938
        %v1940 = vlaneseq
        %v1941 = vshrl.u32 %v1940, 7
        %v1942 = vsub.s32 1, %v1941
        %v1943 = vrot.slane %v1738, %v1942
        %v1944 = vlaneseq
        %v1945 = vshrl.u32 %v1944, 7
        %v1946 = vsub.s32 0, %v1945
        %v1947 = vrot.slane %v1740, %v1946
        %v1948 = vlaneseq
        %v1949 = vshrl.u32 %v1948, 7
        %v1950 = vsub.s32 1, %v1949
        %v1951 = vrot.slane %v1740, %v1950
        %v1952 = vlaneseq
        %v1953 = vshrl.u32 %v1952, 7
        %v1954 = vsub.s32 0, %v1953
        %v1955 = vrot.slane %v1723, %v1954
        %v1956 = vlaneseq
        %v1957 = vshrl.u32 %v1956, 7
        %v1958 = vsub.s32 1, %v1957
        %v1959 = vrot.slane %v1723, %v1958
        %v1960 = vlaneseq
        %v1961 = vshrl.u32 %v1960, 7
        %v1962 = vsub.s32 0, %v1961
        %v1963 = vrot.slane %v1737, %v1962
        %v1964 = vlaneseq
        %v1965 = vshrl.u32 %v1964, 7
        %v1966 = vsub.s32 1, %v1965
        %v1967 = vrot.slane %v1737, %v1966
        %v1968 = vlaneseq
        %v1969 = vshrl.u32 %v1968, 7
        %v1970 = vsub.s32 0, %v1969
        %v1971 = vrot.slane %v1739, %v1970
        %v1972 = vlaneseq
        %v1973 = vshrl.u32 %v1972, 7
        %v1974 = vsub.s32 1, %v1973
        %v1975 = vrot.slane %v1739, %v1974
        %v1976 = vlaneseq
        %v1977 = vshrl.u32 %v1976, 7
        %v1978 = vsub.s32 0, %v1977
        %v1979 = vrot.slane %v1741, %v1978
        %v1980 = vlaneseq
        %v1981 = vshrl.u32 %v1980, 7
        %v1982 = vsub.s32 1, %v1981
        %v1983 = vrot.slane %v1741, %v1982
        %v1984 = vlaneseq
        %v1985 = vshrl.u32 %v1984, 7
        %v1986 = vsub.s32 0, %v1985
        %v1987 = vrot.slane %v1766, %v1986
        %v1988 = vlaneseq
        %v1989 = vshrl.u32 %v1988, 7
        %v1990 = vsub.s32 1, %v1989
        %v1991 = vrot.slane %v1766, %v1990
        %v1992 = vlaneseq
        %v1993 = vshrl.u32 %v1992, 7
        %v1994 = vsub.s32 0, %v1993
        %v1995 = vrot.slane %v1780, %v1994
        %v1996 = vlaneseq
        %v1997 = vshrl.u32 %v1996, 7
        %v1998 = vsub.s32 1, %v1997
        %v1999 = vrot.slane %v1780, %v1998
        %v2000 = vlaneseq
        %v2001 = vshrl.u32 %v2000, 7
        %v2002 = vsub.s32 0, %v2001
        %v2003 = vrot.slane %v1788, %v2002
        %v2004 = vlaneseq
        %v2005 = vshrl.u32 %v2004, 7
        %v2006 = vsub.s32 1, %v2005
        %v2007 = vrot.slane %v1788, %v2006
        %v2008 = vlaneseq
        %v2009 = vshrl.u32 %v2008, 7
        %v2010 = vsub.s32 0, %v2009
        %v2011 = vrot.slane %v1790, %v2010
        %v2012 = vlaneseq
        %v2013 = vshrl.u32 %v2012, 7
        %v2014 = vsub.s32 1, %v2013
        %v2015 = vrot.slane %v1790, %v2014
        %v2016 = vlaneseq
        %v2017 = vshrl.u32 %v2016, 7
        %v2018 = vsub.s32 0, %v2017
        %v2019 = vrot.slane %v1773, %v2018
        %v2020 = vlaneseq
        %v2021 = vshrl.u32 %v2020, 7
        %v2022 = vsub.s32 1, %v2021
        %v2023 = vrot.slane %v1773, %v2022
        %v2024 = vlaneseq
        %v2025 = vshrl.u32 %v2024, 7
        %v2026 = vsub.s32 0, %v2025
        %v2027 = vrot.slane %v1787, %v2026
        %v2028 = vlaneseq
        %v2029 = vshrl.u32 %v2028, 7
        %v2030 = vsub.s32 1, %v2029
        %v2031 = vrot.slane %v1787, %v2030
        %v2032 = vlaneseq
        %v2033 = vshrl.u32 %v2032, 7
        %v2034 = vsub.s32 0, %v2033
        %v2035 = vrot.slane %v1789, %v2034
        %v2036 = vlaneseq
        %v2037 = vshrl.u32 %v2036, 7
        %v2038 = vsub.s32 1, %v2037
        %v2039 = vrot.slane %v1789, %v2038
        %v2040 = vlaneseq
        %v2041 = vshrl.u32 %v2040, 7
        %v2042 = vsub.s32 0, %v2041
        %v2043 = vrot.slane %v1791, %v2042
        %v2044 = vlaneseq
        %v2045 = vshrl.u32 %v2044, 7
        %v2046 = vsub.s32 1, %v2045
        %v2047 = vrot.slane %v1791, %v2046
        %2048 = vrot.lane.b32.xlu0 %v1795, 2
        %v2049 = vpop.permute.xlu0 %2048
        %2050 = vrot.lane.b32.xlu0 %v1799, 2
        %v2051 = vpop.permute.xlu0 %2050
        %2052 = vrot.lane.b32.xlu0 %v1803, 2
        %v2053 = vpop.permute.xlu0 %2052
        %2054 = vrot.lane.b32.xlu0 %v1807, 2
        %v2055 = vpop.permute.xlu0 %2054
        %2056 = vrot.lane.b32.xlu0 %v1811, 2
        %v2057 = vpop.permute.xlu0 %2056
        %2058 = vrot.lane.b32.xlu0 %v1815, 2
        %v2059 = vpop.permute.xlu0 %2058
        %2060 = vrot.lane.b32.xlu0 %v1819, 2
        %v2061 = vpop.permute.xlu0 %2060
        %2062 = vrot.lane.b32.xlu0 %v1823, 2
        %v2063 = vpop.permute.xlu0 %2062
        %2064 = vrot.lane.b32.xlu0 %v1827, 2
        %v2065 = vpop.permute.xlu0 %2064
        %2066 = vrot.lane.b32.xlu0 %v1831, 2
        %v2067 = vpop.permute.xlu0 %2066
        %2068 = vrot.lane.b32.xlu0 %v1835, 2
        %v2069 = vpop.permute.xlu0 %2068
        %2070 = vrot.lane.b32.xlu0 %v1839, 2
        %v2071 = vpop.permute.xlu0 %2070
        %2072 = vrot.lane.b32.xlu0 %v1843, 2
        %v2073 = vpop.permute.xlu0 %2072
        %2074 = vrot.lane.b32.xlu0 %v1847, 2
        %v2075 = vpop.permute.xlu0 %2074
        %2076 = vrot.lane.b32.xlu0 %v1851, 2
        %v2077 = vpop.permute.xlu0 %2076
        %2078 = vrot.lane.b32.xlu0 %v1855, 2
        %v2079 = vpop.permute.xlu0 %2078
        %2080 = vrot.lane.b32.xlu0 %v1859, 2
        %v2081 = vpop.permute.xlu0 %2080
        %2082 = vrot.lane.b32.xlu0 %v1863, 2
        %v2083 = vpop.permute.xlu0 %2082
        %2084 = vrot.lane.b32.xlu0 %v1867, 2
        %v2085 = vpop.permute.xlu0 %2084
        %2086 = vrot.lane.b32.xlu0 %v1871, 2
        %v2087 = vpop.permute.xlu0 %2086
        %2088 = vrot.lane.b32.xlu0 %v1875, 2
        %v2089 = vpop.permute.xlu0 %2088
        %2090 = vrot.lane.b32.xlu0 %v1879, 2
        %v2091 = vpop.permute.xlu0 %2090
        %2092 = vrot.lane.b32.xlu0 %v1883, 2
        %v2093 = vpop.permute.xlu0 %2092
        %2094 = vrot.lane.b32.xlu0 %v1887, 2
        %v2095 = vpop.permute.xlu0 %2094
        %2096 = vrot.lane.b32.xlu0 %v1891, 2
        %v2097 = vpop.permute.xlu0 %2096
        %2098 = vrot.lane.b32.xlu0 %v1895, 2
        %v2099 = vpop.permute.xlu0 %2098
        %2100 = vrot.lane.b32.xlu0 %v1899, 2
        %v2101 = vpop.permute.xlu0 %2100
        %2102 = vrot.lane.b32.xlu0 %v1903, 2
        %v2103 = vpop.permute.xlu0 %2102
        %2104 = vrot.lane.b32.xlu0 %v1907, 2
        %v2105 = vpop.permute.xlu0 %2104
        %2106 = vrot.lane.b32.xlu0 %v1911, 2
        %v2107 = vpop.permute.xlu0 %2106
        %2108 = vrot.lane.b32.xlu0 %v1915, 2
        %v2109 = vpop.permute.xlu0 %2108
        %2110 = vrot.lane.b32.xlu0 %v1919, 2
        %v2111 = vpop.permute.xlu0 %2110
        %2112 = vrot.lane.b32.xlu0 %v1923, 2
        %v2113 = vpop.permute.xlu0 %2112
        %2114 = vrot.lane.b32.xlu0 %v1927, 2
        %v2115 = vpop.permute.xlu0 %2114
        %2116 = vrot.lane.b32.xlu0 %v1931, 2
        %v2117 = vpop.permute.xlu0 %2116
        %2118 = vrot.lane.b32.xlu0 %v1935, 2
        %v2119 = vpop.permute.xlu0 %2118
        %2120 = vrot.lane.b32.xlu0 %v1939, 2
        %v2121 = vpop.permute.xlu0 %2120
        %2122 = vrot.lane.b32.xlu0 %v1943, 2
        %v2123 = vpop.permute.xlu0 %2122
        %2124 = vrot.lane.b32.xlu0 %v1947, 2
        %v2125 = vpop.permute.xlu0 %2124
        %2126 = vrot.lane.b32.xlu0 %v1951, 2
        %v2127 = vpop.permute.xlu0 %2126
        %2128 = vrot.lane.b32.xlu0 %v1955, 2
        %v2129 = vpop.permute.xlu0 %2128
        %2130 = vrot.lane.b32.xlu0 %v1959, 2
        %v2131 = vpop.permute.xlu0 %2130
        %2132 = vrot.lane.b32.xlu0 %v1963, 2
        %v2133 = vpop.permute.xlu0 %2132
        %2134 = vrot.lane.b32.xlu0 %v1967, 2
        %v2135 = vpop.permute.xlu0 %2134
        %2136 = vrot.lane.b32.xlu0 %v1971, 2
        %v2137 = vpop.permute.xlu0 %2136
        %2138 = vrot.lane.b32.xlu0 %v1975, 2
        %v2139 = vpop.permute.xlu0 %2138
        %2140 = vrot.lane.b32.xlu0 %v1979, 2
        %v2141 = vpop.permute.xlu0 %2140
        %2142 = vrot.lane.b32.xlu0 %v1983, 2
        %v2143 = vpop.permute.xlu0 %2142
        %2144 = vrot.lane.b32.xlu0 %v1987, 2
        %v2145 = vpop.permute.xlu0 %2144
        %2146 = vrot.lane.b32.xlu0 %v1991, 2
        %v2147 = vpop.permute.xlu0 %2146
        %2148 = vrot.lane.b32.xlu0 %v1995, 2
        %v2149 = vpop.permute.xlu0 %2148
        %2150 = vrot.lane.b32.xlu0 %v1999, 2
        %v2151 = vpop.permute.xlu0 %2150
        %2152 = vrot.lane.b32.xlu0 %v2003, 2
        %v2153 = vpop.permute.xlu0 %2152
        %2154 = vrot.lane.b32.xlu0 %v2007, 2
        %v2155 = vpop.permute.xlu0 %2154
        %2156 = vrot.lane.b32.xlu0 %v2011, 2
        %v2157 = vpop.permute.xlu0 %2156
        %2158 = vrot.lane.b32.xlu0 %v2015, 2
        %v2159 = vpop.permute.xlu0 %2158
        %2160 = vrot.lane.b32.xlu0 %v2019, 2
        %v2161 = vpop.permute.xlu0 %2160
        %2162 = vrot.lane.b32.xlu0 %v2023, 2
        %v2163 = vpop.permute.xlu0 %2162
        %2164 = vrot.lane.b32.xlu0 %v2027, 2
        %v2165 = vpop.permute.xlu0 %2164
        %2166 = vrot.lane.b32.xlu0 %v2031, 2
        %v2167 = vpop.permute.xlu0 %2166
        %2168 = vrot.lane.b32.xlu0 %v2035, 2
        %v2169 = vpop.permute.xlu0 %2168
        %2170 = vrot.lane.b32.xlu0 %v2039, 2
        %v2171 = vpop.permute.xlu0 %2170
        %2172 = vrot.lane.b32.xlu0 %v2043, 2
        %v2173 = vpop.permute.xlu0 %2172
        %2174 = vrot.lane.b32.xlu0 %v2047, 2
        %v2175 = vpop.permute.xlu0 %2174
        %vm2176 = vcmask 15360
        %v2177 = vsel %vm2176, %v2049, %v2051
        %v2178 = vsel %vm2176, %v2053, %v2055
        %v2179 = vsel %vm2176, %v2057, %v2059
        %v2180 = vsel %vm2176, %v2061, %v2063
        %v2181 = vsel %vm2176, %v2065, %v2067
        %v2182 = vsel %vm2176, %v2069, %v2071
        %v2183 = vsel %vm2176, %v2073, %v2075
        %v2184 = vsel %vm2176, %v2077, %v2079
        %v2185 = vsel %vm2176, %v2081, %v2083
        %v2186 = vsel %vm2176, %v2085, %v2087
        %v2187 = vsel %vm2176, %v2089, %v2091
        %v2188 = vsel %vm2176, %v2093, %v2095
        %v2189 = vsel %vm2176, %v2097, %v2099
        %v2190 = vsel %vm2176, %v2101, %v2103
        %v2191 = vsel %vm2176, %v2105, %v2107
        %v2192 = vsel %vm2176, %v2109, %v2111
        %v2193 = vsel %vm2176, %v2113, %v2115
        %v2194 = vsel %vm2176, %v2117, %v2119
        %v2195 = vsel %vm2176, %v2121, %v2123
        %v2196 = vsel %vm2176, %v2125, %v2127
        %v2197 = vsel %vm2176, %v2129, %v2131
        %v2198 = vsel %vm2176, %v2133, %v2135
        %v2199 = vsel %vm2176, %v2137, %v2139
        %v2200 = vsel %vm2176, %v2141, %v2143
        %v2201 = vsel %vm2176, %v2145, %v2147
        %v2202 = vsel %vm2176, %v2149, %v2151
        %v2203 = vsel %vm2176, %v2153, %v2155
        %v2204 = vsel %vm2176, %v2157, %v2159
        %v2205 = vsel %vm2176, %v2161, %v2163
        %v2206 = vsel %vm2176, %v2165, %v2167
        %v2207 = vsel %vm2176, %v2169, %v2171
        %v2208 = vsel %vm2176, %v2173, %v2175
        %2241 = vst.msk [vmem:[%s181 + $0x7] sm:$0x1] %vm659, %v2177
        %2242 = vst.msk [vmem:[%s181 + $0xf] sm:$0x1] %vm659, %v2178
        %2243 = vst.msk [vmem:[%s181 + $0x17] sm:$0x1] %vm659, %v2179
        %2244 = vst.msk [vmem:[%s181 + $0x1f] sm:$0x1] %vm659, %v2180
        %2245 = vst.msk [vmem:[%s181 + $0x27] sm:$0x1] %vm659, %v2181
        %2246 = vst.msk [vmem:[%s181 + $0x2f] sm:$0x1] %vm659, %v2182
        %2247 = vst.msk [vmem:[%s181 + $0x37] sm:$0x1] %vm659, %v2183
        %2248 = vst.msk [vmem:[%s181 + $0x3f] sm:$0x1] %vm659, %v2184
        %2249 = vst.msk [vmem:[%s181 + $0x47] sm:$0x1] %vm659, %v2185
        %2250 = vst.msk [vmem:[%s181 + $0x4f] sm:$0x1] %vm659, %v2186
        %2251 = vst.msk [vmem:[%s181 + $0x57] sm:$0x1] %vm659, %v2187
        %2252 = vst.msk [vmem:[%s181 + $0x5f] sm:$0x1] %vm659, %v2188
        %2253 = vst.msk [vmem:[%s181 + $0x67] sm:$0x1] %vm659, %v2189
        %2254 = vst.msk [vmem:[%s181 + $0x6f] sm:$0x1] %vm659, %v2190
        %2255 = vst.msk [vmem:[%s181 + $0x77] sm:$0x1] %vm659, %v2191
        %2256 = vst.msk [vmem:[%s181 + $0x7f] sm:$0x1] %vm659, %v2192
        %2257 = vst.msk [vmem:[%s181 + $0x87] sm:$0x1] %vm659, %v2193
        %2258 = vst.msk [vmem:[%s181 + $0x8f] sm:$0x1] %vm659, %v2194
        %2259 = vst.msk [vmem:[%s181 + $0x97] sm:$0x1] %vm659, %v2195
        %2260 = vst.msk [vmem:[%s181 + $0x9f] sm:$0x1] %vm659, %v2196
        %2261 = vst.msk [vmem:[%s181 + $0xa7] sm:$0x1] %vm659, %v2197
        %2262 = vst.msk [vmem:[%s181 + $0xaf] sm:$0x1] %vm659, %v2198
        %2263 = vst.msk [vmem:[%s181 + $0xb7] sm:$0x1] %vm659, %v2199
        %2264 = vst.msk [vmem:[%s181 + $0xbf] sm:$0x1] %vm659, %v2200
        %2265 = vst.msk [vmem:[%s181 + $0xc7] sm:$0x1] %vm659, %v2201
        %2266 = vst.msk [vmem:[%s181 + $0xcf] sm:$0x1] %vm659, %v2202
        %2267 = vst.msk [vmem:[%s181 + $0xd7] sm:$0x1] %vm659, %v2203
        %2268 = vst.msk [vmem:[%s181 + $0xdf] sm:$0x1] %vm659, %v2204
        %2269 = vst.msk [vmem:[%s181 + $0xe7] sm:$0x1] %vm659, %v2205
        %2270 = vst.msk [vmem:[%s181 + $0xef] sm:$0x1] %vm659, %v2206
        %2271 = vst.msk [vmem:[%s181 + $0xf7] sm:$0x1] %vm659, %v2207
        %2272 = vst.msk [vmem:[%s181 + $0xff] sm:$0x1] %vm659, %v2208
        %s2273 = sand.u32 %s106, 1
        %s2274 = sand.u32 %s106, 1
        %s2275 = smul.addr %s2274, 256
        %s2276 = scalar_lea.vmem [#allocation2], %s2275
        // Predicated region
        $region33: #{conv3x3_relu_pallas.1} parent=31 // pred_check
          %p2277 = pneg %p116
        $region34: #{conv3x3_relu_pallas.1} parent=31 // pred_check_branch
          %2279 = sbr.rel (%p2277) target = $region36
        $region35: #{conv3x3_relu_pallas.1} parent=31 // pred_region
          %s2280 = smul.addr %s18, 64
          %s2281 = sadd.s32 %s19, %s2280
          %s2282 = smul.addr %s2281, 8
          %s2283 = scalar_lea.vmem %s3, %s2282
          // Predicated region
          $region37: #{conv3x3_relu_pallas.1} parent=35 // pred_check
            _
          $region38: #{conv3x3_relu_pallas.1} parent=35 // pred_check_branch
            %2285 = sbr.rel (0) target = $region40
          $region39: #{conv3x3_relu_pallas.1} parent=35 // pred_region
            // Predicated region
            $region41: #{conv3x3_relu_pallas.1} parent=39 // pred_check
              _
            $region42: #{conv3x3_relu_pallas.1} parent=39 // pred_check_branch
              %2287 = sbr.rel (0) target = $region44
            $region43: #{conv3x3_relu_pallas.1} parent=39 // pred_region
              // Predicated region
              $region56: #{conv3x3_relu_pallas.1} parent=43 // pred_check
                _
              $region57: #{conv3x3_relu_pallas.1} parent=43 // pred_check_branch
                %2364 = sbr.rel (0) target = $region59
              $region58: #{conv3x3_relu_pallas.1} parent=43 // pred_region
                loop: start=0, step=1, limit=1
                $region60: #{conv3x3_relu_pallas.1} parent=58 // loop_pre_header
                  _
                $region61: #{conv3x3_relu_pallas.1} parent=58 // loop_header
                  %s2366 = sphi 0, %s2370
                  %p2367 = scmp.ge.s32.totalorder %s2366, 1
                  %s2371 = sphi %s2276, %s2276
                  %s2372 = sphi %s2283, %s2283
                $region62: #{conv3x3_relu_pallas.1} parent=58 // loop_header_branch
                  %2369 = sbr.rel (%p2367) target = $region66
                $region63: #{conv3x3_relu_pallas.1} parent=58 // loop_body
                  %v2373 = vld [vmem:[%s2371] sm:$0xff]
                  %2374 = vst [vmem:[%s2372] sm:$0xff] %v2373
                  %v2375 = vld [vmem:[%s2371 + $0x8] sm:$0xff]
                  %2376 = vst [vmem:[%s2372 + $0x10] sm:$0xff] %v2375
                  %v2377 = vld [vmem:[%s2371 + $0x10] sm:$0xff]
                  %2378 = vst [vmem:[%s2372 + $0x20] sm:$0xff] %v2377
                  %v2379 = vld [vmem:[%s2371 + $0x18] sm:$0xff]
                  %2380 = vst [vmem:[%s2372 + $0x30] sm:$0xff] %v2379
                  %v2381 = vld [vmem:[%s2371 + $0x20] sm:$0xff]
                  %2382 = vst [vmem:[%s2372 + $0x40] sm:$0xff] %v2381
                  %v2383 = vld [vmem:[%s2371 + $0x28] sm:$0xff]
                  %2384 = vst [vmem:[%s2372 + $0x50] sm:$0xff] %v2383
                  %v2385 = vld [vmem:[%s2371 + $0x30] sm:$0xff]
                  %2386 = vst [vmem:[%s2372 + $0x60] sm:$0xff] %v2385
                  %v2387 = vld [vmem:[%s2371 + $0x38] sm:$0xff]
                  %2388 = vst [vmem:[%s2372 + $0x70] sm:$0xff] %v2387
                  %v2389 = vld [vmem:[%s2371 + $0x40] sm:$0xff]
                  %2390 = vst [vmem:[%s2372 + $0x80] sm:$0xff] %v2389
                  %v2391 = vld [vmem:[%s2371 + $0x48] sm:$0xff]
                  %2392 = vst [vmem:[%s2372 + $0x90] sm:$0xff] %v2391
                  %v2393 = vld [vmem:[%s2371 + $0x50] sm:$0xff]
                  %2394 = vst [vmem:[%s2372 + $0xa0] sm:$0xff] %v2393
                  %v2395 = vld [vmem:[%s2371 + $0x58] sm:$0xff]
                  %2396 = vst [vmem:[%s2372 + $0xb0] sm:$0xff] %v2395
                  %v2397 = vld [vmem:[%s2371 + $0x60] sm:$0xff]
                  %2398 = vst [vmem:[%s2372 + $0xc0] sm:$0xff] %v2397
                  %v2399 = vld [vmem:[%s2371 + $0x68] sm:$0xff]
                  %2400 = vst [vmem:[%s2372 + $0xd0] sm:$0xff] %v2399
                  %v2401 = vld [vmem:[%s2371 + $0x70] sm:$0xff]
                  %2402 = vst [vmem:[%s2372 + $0xe0] sm:$0xff] %v2401
                  %v2403 = vld [vmem:[%s2371 + $0x78] sm:$0xff]
                  %2404 = vst [vmem:[%s2372 + $0xf0] sm:$0xff] %v2403
                  %v2405 = vld [vmem:[%s2371 + $0x80] sm:$0xff]
                  %2406 = vst [vmem:[%s2372 + $0x100] sm:$0xff] %v2405
                  %v2407 = vld [vmem:[%s2371 + $0x88] sm:$0xff]
                  %2408 = vst [vmem:[%s2372 + $0x110] sm:$0xff] %v2407
                  %v2409 = vld [vmem:[%s2371 + $0x90] sm:$0xff]
                  %2410 = vst [vmem:[%s2372 + $0x120] sm:$0xff] %v2409
                  %v2411 = vld [vmem:[%s2371 + $0x98] sm:$0xff]
                  %2412 = vst [vmem:[%s2372 + $0x130] sm:$0xff] %v2411
                  %v2413 = vld [vmem:[%s2371 + $0xa0] sm:$0xff]
                  %2414 = vst [vmem:[%s2372 + $0x140] sm:$0xff] %v2413
                  %v2415 = vld [vmem:[%s2371 + $0xa8] sm:$0xff]
                  %2416 = vst [vmem:[%s2372 + $0x150] sm:$0xff] %v2415
                  %v2417 = vld [vmem:[%s2371 + $0xb0] sm:$0xff]
                  %2418 = vst [vmem:[%s2372 + $0x160] sm:$0xff] %v2417
                  %v2419 = vld [vmem:[%s2371 + $0xb8] sm:$0xff]
                  %2420 = vst [vmem:[%s2372 + $0x170] sm:$0xff] %v2419
                  %v2421 = vld [vmem:[%s2371 + $0xc0] sm:$0xff]
                  %2422 = vst [vmem:[%s2372 + $0x180] sm:$0xff] %v2421
                  %v2423 = vld [vmem:[%s2371 + $0xc8] sm:$0xff]
                  %2424 = vst [vmem:[%s2372 + $0x190] sm:$0xff] %v2423
                  %v2425 = vld [vmem:[%s2371 + $0xd0] sm:$0xff]
                  %2426 = vst [vmem:[%s2372 + $0x1a0] sm:$0xff] %v2425
                  %v2427 = vld [vmem:[%s2371 + $0xd8] sm:$0xff]
                  %2428 = vst [vmem:[%s2372 + $0x1b0] sm:$0xff] %v2427
                  %v2429 = vld [vmem:[%s2371 + $0xe0] sm:$0xff]
                  %2430 = vst [vmem:[%s2372 + $0x1c0] sm:$0xff] %v2429
                  %v2431 = vld [vmem:[%s2371 + $0xe8] sm:$0xff]
                  %2432 = vst [vmem:[%s2372 + $0x1d0] sm:$0xff] %v2431
                  %v2433 = vld [vmem:[%s2371 + $0xf0] sm:$0xff]
                  %2434 = vst [vmem:[%s2372 + $0x1e0] sm:$0xff] %v2433
                  %v2435 = vld [vmem:[%s2371 + $0xf8] sm:$0xff]
                  %2436 = vst [vmem:[%s2372 + $0x1f0] sm:$0xff] %v2435
                $region64: #{conv3x3_relu_pallas.1} parent=58 // loop_footer
                  %s2370 = sadd.s32 1, %s2366
                $region65: #{conv3x3_relu_pallas.1} parent=58 // loop_footer_branch
                  %2365 = sbr.rel target = $region61
                $region66: #{conv3x3_relu_pallas.1} parent=58 // loop_exit
                  _
              $region59: #{conv3x3_relu_pallas.1} parent=43 // pred_fallthru
                _
              // Predicated region
              $region67: #{conv3x3_relu_pallas.1} parent=43 // pred_check
                _
              $region68: #{conv3x3_relu_pallas.1} parent=43 // pred_check_branch
                %2438 = sbr.rel target = $region70
              $region69: #{conv3x3_relu_pallas.1} parent=43 // pred_region
                _
              $region70: #{conv3x3_relu_pallas.1} parent=43 // pred_fallthru
                _
            $region44: #{conv3x3_relu_pallas.1} parent=39 // pred_fallthru
              _
            // Predicated region
            $region45: #{conv3x3_relu_pallas.1} parent=39 // pred_check
              _
            $region46: #{conv3x3_relu_pallas.1} parent=39 // pred_check_branch
              %2289 = sbr.rel target = $region48
            $region47: #{conv3x3_relu_pallas.1} parent=39 // pred_region
              loop: start=0, step=1, limit=1
              $region49: #{conv3x3_relu_pallas.1} parent=47 // loop_pre_header
                _
              $region50: #{conv3x3_relu_pallas.1} parent=47 // loop_header
                %s2292 = sphi 0, %s2296
                %p2293 = scmp.ge.s32.totalorder %s2292, 1
                %s2297 = sphi %s2276, %s2276
                %s2298 = sphi %s2283, %s2283
              $region51: #{conv3x3_relu_pallas.1} parent=47 // loop_header_branch
                %2295 = sbr.rel (%p2293) target = $region55
              $region52: #{conv3x3_relu_pallas.1} parent=47 // loop_body
                %v2299 = vld [vmem:[%s2297] sm:$0xff]
                %2300 = vst [vmem:[%s2298] sm:$0xff] %v2299
                %v2301 = vld [vmem:[%s2297 + $0x8] sm:$0xff]
                %2302 = vst [vmem:[%s2298 + $0x10] sm:$0xff] %v2301
                %v2303 = vld [vmem:[%s2297 + $0x10] sm:$0xff]
                %2304 = vst [vmem:[%s2298 + $0x20] sm:$0xff] %v2303
                %v2305 = vld [vmem:[%s2297 + $0x18] sm:$0xff]
                %2306 = vst [vmem:[%s2298 + $0x30] sm:$0xff] %v2305
                %v2307 = vld [vmem:[%s2297 + $0x20] sm:$0xff]
                %2308 = vst [vmem:[%s2298 + $0x40] sm:$0xff] %v2307
                %v2309 = vld [vmem:[%s2297 + $0x28] sm:$0xff]
                %2310 = vst [vmem:[%s2298 + $0x50] sm:$0xff] %v2309
                %v2311 = vld [vmem:[%s2297 + $0x30] sm:$0xff]
                %2312 = vst [vmem:[%s2298 + $0x60] sm:$0xff] %v2311
                %v2313 = vld [vmem:[%s2297 + $0x38] sm:$0xff]
                %2314 = vst [vmem:[%s2298 + $0x70] sm:$0xff] %v2313
                %v2315 = vld [vmem:[%s2297 + $0x40] sm:$0xff]
                %2316 = vst [vmem:[%s2298 + $0x80] sm:$0xff] %v2315
                %v2317 = vld [vmem:[%s2297 + $0x48] sm:$0xff]
                %2318 = vst [vmem:[%s2298 + $0x90] sm:$0xff] %v2317
                %v2319 = vld [vmem:[%s2297 + $0x50] sm:$0xff]
                %2320 = vst [vmem:[%s2298 + $0xa0] sm:$0xff] %v2319
                %v2321 = vld [vmem:[%s2297 + $0x58] sm:$0xff]
                %2322 = vst [vmem:[%s2298 + $0xb0] sm:$0xff] %v2321
                %v2323 = vld [vmem:[%s2297 + $0x60] sm:$0xff]
                %2324 = vst [vmem:[%s2298 + $0xc0] sm:$0xff] %v2323
                %v2325 = vld [vmem:[%s2297 + $0x68] sm:$0xff]
                %2326 = vst [vmem:[%s2298 + $0xd0] sm:$0xff] %v2325
                %v2327 = vld [vmem:[%s2297 + $0x70] sm:$0xff]
                %2328 = vst [vmem:[%s2298 + $0xe0] sm:$0xff] %v2327
                %v2329 = vld [vmem:[%s2297 + $0x78] sm:$0xff]
                %2330 = vst [vmem:[%s2298 + $0xf0] sm:$0xff] %v2329
                %v2331 = vld [vmem:[%s2297 + $0x80] sm:$0xff]
                %2332 = vst [vmem:[%s2298 + $0x100] sm:$0xff] %v2331
                %v2333 = vld [vmem:[%s2297 + $0x88] sm:$0xff]
                %2334 = vst [vmem:[%s2298 + $0x110] sm:$0xff] %v2333
                %v2335 = vld [vmem:[%s2297 + $0x90] sm:$0xff]
                %2336 = vst [vmem:[%s2298 + $0x120] sm:$0xff] %v2335
                %v2337 = vld [vmem:[%s2297 + $0x98] sm:$0xff]
                %2338 = vst [vmem:[%s2298 + $0x130] sm:$0xff] %v2337
                %v2339 = vld [vmem:[%s2297 + $0xa0] sm:$0xff]
                %2340 = vst [vmem:[%s2298 + $0x140] sm:$0xff] %v2339
                %v2341 = vld [vmem:[%s2297 + $0xa8] sm:$0xff]
                %2342 = vst [vmem:[%s2298 + $0x150] sm:$0xff] %v2341
                %v2343 = vld [vmem:[%s2297 + $0xb0] sm:$0xff]
                %2344 = vst [vmem:[%s2298 + $0x160] sm:$0xff] %v2343
                %v2345 = vld [vmem:[%s2297 + $0xb8] sm:$0xff]
                %2346 = vst [vmem:[%s2298 + $0x170] sm:$0xff] %v2345
                %v2347 = vld [vmem:[%s2297 + $0xc0] sm:$0xff]
                %2348 = vst [vmem:[%s2298 + $0x180] sm:$0xff] %v2347
                %v2349 = vld [vmem:[%s2297 + $0xc8] sm:$0xff]
                %2350 = vst [vmem:[%s2298 + $0x190] sm:$0xff] %v2349
                %v2351 = vld [vmem:[%s2297 + $0xd0] sm:$0xff]
                %2352 = vst [vmem:[%s2298 + $0x1a0] sm:$0xff] %v2351
                %v2353 = vld [vmem:[%s2297 + $0xd8] sm:$0xff]
                %2354 = vst [vmem:[%s2298 + $0x1b0] sm:$0xff] %v2353
                %v2355 = vld [vmem:[%s2297 + $0xe0] sm:$0xff]
                %2356 = vst [vmem:[%s2298 + $0x1c0] sm:$0xff] %v2355
                %v2357 = vld [vmem:[%s2297 + $0xe8] sm:$0xff]
                %2358 = vst [vmem:[%s2298 + $0x1d0] sm:$0xff] %v2357
                %v2359 = vld [vmem:[%s2297 + $0xf0] sm:$0xff]
                %2360 = vst [vmem:[%s2298 + $0x1e0] sm:$0xff] %v2359
                %v2361 = vld [vmem:[%s2297 + $0xf8] sm:$0xff]
                %2362 = vst [vmem:[%s2298 + $0x1f0] sm:$0xff] %v2361
              $region53: #{conv3x3_relu_pallas.1} parent=47 // loop_footer
                %s2296 = sadd.s32 1, %s2292
              $region54: #{conv3x3_relu_pallas.1} parent=47 // loop_footer_branch
                %2291 = sbr.rel target = $region50
              $region55: #{conv3x3_relu_pallas.1} parent=47 // loop_exit
                _
            $region48: #{conv3x3_relu_pallas.1} parent=39 // pred_fallthru
              _
          $region40: #{conv3x3_relu_pallas.1} parent=35 // pred_fallthru
            _
          %2439 = vnop
        $region36: #{conv3x3_relu_pallas.1} parent=31 // pred_fallthru
          _
      $region32: #{conv3x3_relu_pallas.1} parent=5 // pred_fallthru
        _
      %p2440 = scmp.le.s32.totalorder 2, %s9
      // Predicated region
      $region71: #{conv3x3_relu_pallas.1} parent=5 // pred_check
        %p2441 = pneg %p2440
      $region72: #{conv3x3_relu_pallas.1} parent=5 // pred_check_branch
        %2443 = sbr.rel (%p2441) target = $region74
      $region73: #{conv3x3_relu_pallas.1} parent=5 // pred_region
        %s2444 = ssub.s32 %s9, 2
        // Predicated region
        $region75: #{conv3x3_relu_pallas.1} parent=73 // pred_check
          %p2445 = pneg %p122
        $region76: #{conv3x3_relu_pallas.1} parent=73 // pred_check_branch
          %2447 = sbr.rel (%p2445) target = $region78
        $region77: #{conv3x3_relu_pallas.1} parent=73 // pred_region
          %s2448 = sand.u32 %s107, 1
          %s2449 = sand.u32 %s107, 1
          %s2450 = smul.addr %s2449, 256
          %s2451 = scalar_lea.vmem [#allocation2], %s2450
        $region78: #{conv3x3_relu_pallas.1} parent=73 // pred_fallthru
          _
      $region74: #{conv3x3_relu_pallas.1} parent=5 // pred_fallthru
        _
    $region6: #{conv3x3_relu_pallas.1} parent=1 // loop_footer
      %s13 = sadd.s32 1, %s9
    $region7: #{conv3x3_relu_pallas.1} parent=1 // loop_footer_branch
      %8 = sbr.rel target = $region3
    $region8: #{conv3x3_relu_pallas.1} parent=1 // loop_exit
      _

</llo_original>
